<compile_context>
chip_gen: v7x
topology: tpu7x:2x2x1
jax: 0.10.0
libtpu: 0.0.40
codegen_flags: <defaults>
</compile_context>

<pallas_src>
import functools

import jax
import jax.numpy as jnp
from jax import lax
from jax.experimental import pallas as pl
from jax.experimental.pallas import tpu as pltpu


def _mean_conv1x1_kernel(x_ref, w_ref, b_ref, o_ref, *, inv_hw):
    # x_ref : (NB, C_in, HW)   activation tile (spatial dims flattened)
    # w_ref : (C_out, C_in)    1x1-conv weight in natural orientation
    # b_ref : (1, C_out)       bias, lane-oriented
    # o_ref : (NB, C_out)      lane-dense output block
    x = x_ref[...].astype(jnp.float32)
    # Global spatial mean: single lane-axis reduction, f32 accumulation.
    mean = jnp.sum(x, axis=-1) * inv_hw                           # (NB, C_in)
    # 1x1 conv == MXU matmul: contract C_in of both operands -> (NB, C_out).
    y = lax.dot_general(
        mean,
        w_ref[...].astype(jnp.float32),
        dimension_numbers=(((1,), (1,)), ((), ())),
        preferred_element_type=jnp.float32,
    )
    o_ref[...] = (y + b_ref[...]).astype(o_ref.dtype)


def _round_up(v, m):
    return -(-v // m) * m


def _pick_batch_block(n, c_in, hw, c_out,
                      vmem_budget_bytes=26 * 1024 * 1024,
                      buffers=3):
    """Largest divisor of n whose multi-buffered flattened input tile (plus
    weight/bias/output) fits the VMEM budget."""
    pad_cin = _round_up(c_in, 8)
    pad_hw = _round_up(hw, 128)
    per_sample = pad_cin * pad_hw * 4                 # padded f32 bytes / sample
    # Fixed residents: weight (C_out_pad x C_in_pad), bias row, small output.
    fixed = (_round_up(c_out, 8) * pad_hw * 0 +       # (no, weight uses C_in lanes)
             _round_up(c_out, 8) * _round_up(c_in, 128) * 4 +
             8 * 128 * 4 +
             2 * 8 * _round_up(c_out, 128) * 4)
    cap = max(1, (vmem_budget_bytes - fixed) // (buffers * per_sample))
    cap = min(cap, n)
    nb = 1
    for d in range(1, cap + 1):
        if n % d == 0:
            nb = d
    return nb


def mean_conv1x1(x_nchw, weight, bias):
    """x_nchw: (N, C_in, H, W); weight: (C_out, C_in, 1, 1); bias: (C_out,)."""
    N, C_in, H, W = x_nchw.shape
    C_out = weight.shape[0]
    HW = H * W

    # Free metadata reshape for contiguous NCHW: merge trailing spatial dims.
    x3d = x_nchw.reshape(N, C_in, HW)                 # (N, C_in, HW)
    w2d = weight.reshape(C_out, C_in)                 # natural orientation
    b_row = bias.reshape(1, C_out)                    # (1, C_out)

    NB = _pick_batch_block(N, C_in, HW, C_out)
    grid_steps = N // NB
    grid = (grid_steps,)

    kernel = functools.partial(_mean_conv1x1_kernel, inv_hw=float(1.0 / HW))

    # Triple-buffer the activation only when there are enough grid steps to
    # benefit (tile is ~1.55 MB after flattening, so this is cheap).
    if grid_steps > 2:
        x_spec = pl.BlockSpec((NB, C_in, HW), lambda n: (n, 0, 0),
                              pipeline_mode=pl.Buffered(3))
    else:
        x_spec = pl.BlockSpec((NB, C_in, HW), lambda n: (n, 0, 0))

    cost = pl.CostEstimate(
        flops=2 * N * (C_in * HW + C_in * C_out),
        transcendentals=0,
        bytes_accessed=(N * C_in * HW * x_nchw.dtype.itemsize
                        + C_in * C_out * 4 + C_out * 4 + N * C_out * 4),
    )

    out = pl.pallas_call(
        kernel,
        out_shape=jax.ShapeDtypeStruct((N, C_out), jnp.float32),
        grid_spec=pltpu.PrefetchScalarGridSpec(
            num_scalar_prefetch=0,
            grid=grid,
            in_specs=[
                x_spec,
                pl.BlockSpec((C_out, C_in), lambda n: (0, 0)),
                pl.BlockSpec((1, C_out), lambda n: (0, 0)),
            ],
            out_specs=pl.BlockSpec((NB, C_out), lambda n: (n, 0)),
        ),
        compiler_params=pltpu.CompilerParams(
            dimension_semantics=("parallel",),
            vmem_limit_bytes=32 * 1024 * 1024,
        ),
        cost_estimate=cost,
    )(x3d, w2d, b_row)

    return out.reshape(N, C_out, 1, 1)                # NCHW output


if __name__ == "__main__":
    key = jax.random.PRNGKey(0)
    k_x, k_w, k_b = jax.random.split(key, 3)

    # Shapes implied by the module: input (1, 432, 28, 28), Conv2d(432 -> 18, 1x1).
    N, C_in, H, W = 1, 432, 28, 28
    C_out = 18

    x = jax.random.normal(k_x, (N, C_in, H, W), dtype=jnp.float32)
    weight = jax.random.normal(k_w, (C_out, C_in, 1, 1), dtype=jnp.float32) * 0.05
    bias = jax.random.normal(k_b, (C_out,), dtype=jnp.float32) * 0.05

    out = mean_conv1x1(x, weight, bias)
    out = jax.block_until_ready(out)

    # Plain-JAX reference (same semantics as the PyTorch module).
    ref_mean = jnp.mean(x, axis=(2, 3), keepdims=True)            # (N, C_in, 1, 1)
    ref = jnp.einsum("oc,ncij->noij", weight.reshape(C_out, C_in),
                     ref_mean) + bias.reshape(1, C_out, 1, 1)

    assert out.shape == (N, C_out, 1, 1)
    assert jnp.allclose(out, ref, atol=1e-4, rtol=1e-4), "mismatch vs reference"

    print("KERNEL_OK")
</pallas_src>

<mosaic_0001>
module attributes {stable_mosaic.version = 11 : i64} {
  func.func @_mean_conv1x1_kernel(%arg0: i32, %arg1: memref<1x432x784xf32, #tpu.memory_space<vmem>>, %arg2: memref<18x432xf32, #tpu.memory_space<vmem>>, %arg3: memref<1x18xf32, #tpu.memory_space<vmem>>, %arg4: memref<1x18xf32, #tpu.memory_space<vmem>>) attributes {dimension_semantics = [#tpu.dimension_semantics<parallel>], iteration_bounds = array<i64: 1>, scalar_prefetch = 0 : i64, scratch_operands = 0 : i64, tpu.core_type = #tpu.core_type<tc>, window_params = [{transform_indices = @transform_0, window_bounds = array<i64: 1, 432, 784>}, {pipeline_mode = #tpu.pipeline_mode<synchronous>, transform_indices = @transform_1, window_bounds = array<i64: 18, 432>}, {pipeline_mode = #tpu.pipeline_mode<synchronous>, transform_indices = @transform_2, window_bounds = array<i64: 1, 18>}, {transform_indices = @transform_3, window_bounds = array<i64: 1, 18>}]} {
    %c0 = arith.constant 0 : index
    %c0_0 = arith.constant 0 : index
    %c0_1 = arith.constant 0 : index
    %0 = vector.load %arg1[%c0, %c0_0, %c0_1] : memref<1x432x784xf32, #tpu.memory_space<vmem>>, vector<1x432x784xf32>
    %cst = arith.constant dense<0.000000e+00> : vector<1x432xf32>
    %1 = vector.multi_reduction <add>, %0, %cst [2] : vector<1x432x784xf32> to vector<1x432xf32>
    %cst_2 = arith.constant 0.00127551018 : f32
    %2 = vector.broadcast %cst_2 : f32 to vector<1x432xf32>
    %3 = arith.mulf %1, %2 : vector<1x432xf32>
    %c0_3 = arith.constant 0 : index
    %c0_4 = arith.constant 0 : index
    %4 = vector.load %arg2[%c0_3, %c0_4] : memref<18x432xf32, #tpu.memory_space<vmem>>, vector<18x432xf32>
    %cst_5 = arith.constant dense<0.000000e+00> : vector<1x18xf32>
    %5 = tpu.matmul %3, %4, %cst_5 {dimension_numbers = #tpu.dot_dimension_numbers<[1], [1], [0], [0], [0, 0, 1, 0], [], []>} : vector<1x432xf32>, vector<18x432xf32>, vector<1x18xf32> -> vector<1x18xf32>
    %c0_6 = arith.constant 0 : index
    %c0_7 = arith.constant 0 : index
    %6 = vector.load %arg3[%c0_6, %c0_7] : memref<1x18xf32, #tpu.memory_space<vmem>>, vector<1x18xf32>
    %7 = arith.addf %5, %6 : vector<1x18xf32>
    %c0_8 = arith.constant 0 : index
    %c0_9 = arith.constant 0 : index
    %8 = vector.load %arg4[%c0_8, %c0_9] : memref<1x18xf32, #tpu.memory_space<vmem>>, vector<1x18xf32>
    tpu.vector_store %arg4[%c0_8, %c0_9], %7 {strides = array<i32>} : memref<1x18xf32, #tpu.memory_space<vmem>>, vector<1x18xf32>,
    return
  }
  func.func @transform_0(%arg0: i32) -> (i32, i32, i32) {
    %c0_i32 = arith.constant 0 : i32
    %c0_i32_0 = arith.constant 0 : i32
    %c0_i32_1 = arith.constant 0 : i32
    return %arg0, %c0_i32, %c0_i32_0 : i32, i32, i32
  }
  func.func @transform_1(%arg0: i32) -> (i32, i32) {
    %c0_i32 = arith.constant 0 : i32
    %c0_i32_0 = arith.constant 0 : i32
    %c0_i32_1 = arith.constant 0 : i32
    return %c0_i32, %c0_i32_0 : i32, i32
  }
  func.func @transform_2(%arg0: i32) -> (i32, i32) {
    %c0_i32 = arith.constant 0 : i32
    %c0_i32_0 = arith.constant 0 : i32
    %c0_i32_1 = arith.constant 0 : i32
    return %c0_i32, %c0_i32_0 : i32, i32
  }
  func.func @transform_3(%arg0: i32) -> (i32, i32) {
    %c0_i32 = arith.constant 0 : i32
    %c0_i32_0 = arith.constant 0 : i32
    return %arg0, %c0_i32 : i32, i32
  }
}

</mosaic_0001>

<llo_original>
// kernel: tpu_custom_call.1
$region0: #{tpu_custom_call.1}
  #allocation0 [shape = 'u32[]', space=smem, size = 0x4, offset = 0x4, fixed_abs, tag = 'smem constant byte address 0x4 - core index']
  #allocation1 [shape = 'u32[144,128]{1,0:T(1,128)}', space=vmem, size = 0x12000, scoped, tag = 'internal scratch']
  %s0 = inlined_call_operand.hbm [shape: f32[1,432,784], index: 0, kind: input, shape index: {}]
  %s1 = inlined_call_operand.hbm [shape: f32[18,432], index: 1, kind: input, shape index: {}]
  %s2 = inlined_call_operand.hbm [shape: f32[1,18], index: 2, kind: input, shape index: {}]
  %s3 = inlined_call_operand.hbm [shape: f32[1,18], index: 3, kind: output, shape index: {}]
  %s4 = sld [smem:[#allocation0]]
  $region34: #{tpu_custom_call.1} parent=0
    _
  %s6 = ssub.s32 1, %s4
  %s7 = scalar_select 0, %s6, %s4
  $region1: #{tpu_custom_call.1} parent=0
    #allocation2 [shape = 'u8[1548288]{0}', space=vmem, size = 0x17a000, scoped, tag = 'input window, operand 0, single buffered']
    #allocation3 [shape = 's32[1]{0}', space=sflag, size = 0x4, scoped, tag = 'scoped memory for tpu_custom_call.1']
    #allocation4 [shape = 's32[1]{0}', space=sflag, size = 0x4, scoped, tag = 'scoped memory for tpu_custom_call.1']
    #allocation5 [shape = 'u8[49152]{0}', space=vmem, size = 0xc000, scoped, tag = 'input window, operand 1, single buffered']
    #allocation6 [shape = 's32[1]{0}', space=sflag, size = 0x4, scoped, tag = 'scoped memory for tpu_custom_call.1']
    #allocation7 [shape = 'u8[512]{0}', space=vmem, size = 0x400, scoped, tag = 'input window, operand 2, single buffered']
    #allocation8 [shape = 'u8[512]{0}', space=vmem, size = 0x400, scoped, tag = 'output window, operand 0, single buffered']
    %8 = vsyncpa [#allocation3], 0
    %9 = vsyncpa [#allocation6], 0
    %10 = vsyncpa [#allocation4], 0
    // Predicated region
    $region2: #{tpu_custom_call.1} parent=1 // pred_check
      _
    $region3: #{tpu_custom_call.1} parent=1 // pred_check_branch
      %12 = sbr.rel (0) target = $region5
    $region4: #{tpu_custom_call.1} parent=1 // pred_region
      %s14 = ssub.s32 48384, 48384
      %15 = vsyncadd [#allocation3], %s14
      %s16 = sshll.u32 [#allocation2], 4
      %s17 = int_to_ptr.vmem [resolvable:$true] %s16
      %22 = dma.hbm_to_vmem [thread:$0]  %s0, 48384, %s17, [#allocation3], 896, 896, 56
    $region5: #{tpu_custom_call.1} parent=1 // pred_fallthru
      _
    // Predicated region
    $region6: #{tpu_custom_call.1} parent=1 // pred_check
      _
    $region7: #{tpu_custom_call.1} parent=1 // pred_check_branch
      %24 = sbr.rel (0) target = $region9
    $region8: #{tpu_custom_call.1} parent=1 // pred_region
      %s26 = ssub.s32 1536, 1536
      %27 = vsyncadd [#allocation6], %s26
      %s28 = sshll.u32 [#allocation5], 4
      %s29 = int_to_ptr.vmem [resolvable:$true] %s28
      %34 = dma.hbm_to_vmem [thread:$0]  %s1, 1536, %s29, [#allocation6], 512, 512, 32
    $region9: #{tpu_custom_call.1} parent=1 // pred_fallthru
      _
    // Predicated region
    $region10: #{tpu_custom_call.1} parent=1 // pred_check
      _
    $region11: #{tpu_custom_call.1} parent=1 // pred_check_branch
      %36 = sbr.rel (0) target = $region13
    $region12: #{tpu_custom_call.1} parent=1 // pred_region
      %s38 = ssub.s32 16, 16
      %39 = vsyncadd [#allocation6], %s38
      %s41 = sshll.u32 [#allocation7], 4
      %s42 = int_to_ptr.vmem [resolvable:$true] %s41
      %44 = dma.hbm_to_vmem [thread:$0]  %s2, 16, %s42, [#allocation6]
    $region13: #{tpu_custom_call.1} parent=1 // pred_fallthru
      _
    // Predicated region
    $region14: #{tpu_custom_call.1} parent=1 // pred_check
      _
    $region15: #{tpu_custom_call.1} parent=1 // pred_check_branch
      %46 = sbr.rel (0) target = $region17
    $region16: #{tpu_custom_call.1} parent=1 // pred_region
      %47 = dma.done [#allocation3], 48384
    $region17: #{tpu_custom_call.1} parent=1 // pred_fallthru
      _
    // Predicated region
    $region18: #{tpu_custom_call.1} parent=1 // pred_check
      _
    $region19: #{tpu_custom_call.1} parent=1 // pred_check_branch
      %49 = sbr.rel (0) target = $region21
    $region20: #{tpu_custom_call.1} parent=1 // pred_region
      %50 = dma.done [#allocation6], 1536
    $region21: #{tpu_custom_call.1} parent=1 // pred_fallthru
      _
    // Predicated region
    $region22: #{tpu_custom_call.1} parent=1 // pred_check
      _
    $region23: #{tpu_custom_call.1} parent=1 // pred_check_branch
      %52 = sbr.rel (0) target = $region25
    $region24: #{tpu_custom_call.1} parent=1 // pred_region
      %53 = dma.done [#allocation6], 16
    $region25: #{tpu_custom_call.1} parent=1 // pred_fallthru
      _
    %v54 = vld [vmem:[#allocation2] sm:$0xff]
    %v55 = vld [vmem:[#allocation2 + $0x8] sm:$0xff]
    %v56 = vld [vmem:[#allocation2 + $0x10] sm:$0xff]
    %v57 = vld [vmem:[#allocation2 + $0x18] sm:$0xff]
    %v58 = vld [vmem:[#allocation2 + $0x20] sm:$0xff]
    %v59 = vld [vmem:[#allocation2 + $0x28] sm:$0xff]
    %v60 = vld [vmem:[#allocation2 + $0x30] sm:$0xff]
    %v61 = vld [vmem:[#allocation2 + $0x38] sm:$0xff]
    %v62 = vld [vmem:[#allocation2 + $0x40] sm:$0xff]
    %v63 = vld [vmem:[#allocation2 + $0x48] sm:$0xff]
    %v64 = vld [vmem:[#allocation2 + $0x50] sm:$0xff]
    %v65 = vld [vmem:[#allocation2 + $0x58] sm:$0xff]
    %v66 = vld [vmem:[#allocation2 + $0x60] sm:$0xff]
    %v67 = vld [vmem:[#allocation2 + $0x68] sm:$0xff]
    %v68 = vld [vmem:[#allocation2 + $0x70] sm:$0xff]
    %v69 = vld [vmem:[#allocation2 + $0x78] sm:$0xff]
    %v70 = vld [vmem:[#allocation2 + $0x80] sm:$0xff]
    %v71 = vld [vmem:[#allocation2 + $0x88] sm:$0xff]
    %v72 = vld [vmem:[#allocation2 + $0x90] sm:$0xff]
    %v73 = vld [vmem:[#allocation2 + $0x98] sm:$0xff]
    %v74 = vld [vmem:[#allocation2 + $0xa0] sm:$0xff]
    %v75 = vld [vmem:[#allocation2 + $0xa8] sm:$0xff]
    %v76 = vld [vmem:[#allocation2 + $0xb0] sm:$0xff]
    %v77 = vld [vmem:[#allocation2 + $0xb8] sm:$0xff]
    %v78 = vld [vmem:[#allocation2 + $0xc0] sm:$0xff]
    %v79 = vld [vmem:[#allocation2 + $0xc8] sm:$0xff]
    %v80 = vld [vmem:[#allocation2 + $0xd0] sm:$0xff]
    %v81 = vld [vmem:[#allocation2 + $0xd8] sm:$0xff]
    %v82 = vld [vmem:[#allocation2 + $0xe0] sm:$0xff]
    %v83 = vld [vmem:[#allocation2 + $0xe8] sm:$0xff]
    %v84 = vld [vmem:[#allocation2 + $0xf0] sm:$0xff]
    %v85 = vld [vmem:[#allocation2 + $0xf8] sm:$0xff]
    %v86 = vld [vmem:[#allocation2 + $0x100] sm:$0xff]
    %v87 = vld [vmem:[#allocation2 + $0x108] sm:$0xff]
    %v88 = vld [vmem:[#allocation2 + $0x110] sm:$0xff]
    %v89 = vld [vmem:[#allocation2 + $0x118] sm:$0xff]
    %v90 = vld [vmem:[#allocation2 + $0x120] sm:$0xff]
    %v91 = vld [vmem:[#allocation2 + $0x128] sm:$0xff]
    %v92 = vld [vmem:[#allocation2 + $0x130] sm:$0xff]
    %v93 = vld [vmem:[#allocation2 + $0x138] sm:$0xff]
    %v94 = vld [vmem:[#allocation2 + $0x140] sm:$0xff]
    %v95 = vld [vmem:[#allocation2 + $0x148] sm:$0xff]
    %v96 = vld [vmem:[#allocation2 + $0x150] sm:$0xff]
    %v97 = vld [vmem:[#allocation2 + $0x158] sm:$0xff]
    %v98 = vld [vmem:[#allocation2 + $0x160] sm:$0xff]
    %v99 = vld [vmem:[#allocation2 + $0x168] sm:$0xff]
    %v100 = vld [vmem:[#allocation2 + $0x170] sm:$0xff]
    %v101 = vld [vmem:[#allocation2 + $0x178] sm:$0xff]
    %v102 = vld [vmem:[#allocation2 + $0x180] sm:$0xff]
    %v103 = vld [vmem:[#allocation2 + $0x188] sm:$0xff]
    %v104 = vld [vmem:[#allocation2 + $0x190] sm:$0xff]
    %v105 = vld [vmem:[#allocation2 + $0x198] sm:$0xff]
    %v106 = vld [vmem:[#allocation2 + $0x1a0] sm:$0xff]
    %v107 = vld [vmem:[#allocation2 + $0x1a8] sm:$0xff]
    %v108 = vld [vmem:[#allocation2 + $0x1b0] sm:$0xff]
    %v109 = vld [vmem:[#allocation2 + $0x1b8] sm:$0xff]
    %v110 = vld [vmem:[#allocation2 + $0x1c0] sm:$0xff]
    %v111 = vld [vmem:[#allocation2 + $0x1c8] sm:$0xff]
    %v112 = vld [vmem:[#allocation2 + $0x1d0] sm:$0xff]
    %v113 = vld [vmem:[#allocation2 + $0x1d8] sm:$0xff]
    %v114 = vld [vmem:[#allocation2 + $0x1e0] sm:$0xff]
    %v115 = vld [vmem:[#allocation2 + $0x1e8] sm:$0xff]
    %v116 = vld [vmem:[#allocation2 + $0x1f0] sm:$0xff]
    %v117 = vld [vmem:[#allocation2 + $0x1f8] sm:$0xff]
    %v118 = vld [vmem:[#allocation2 + $0x200] sm:$0xff]
    %v119 = vld [vmem:[#allocation2 + $0x208] sm:$0xff]
    %v120 = vld [vmem:[#allocation2 + $0x210] sm:$0xff]
    %v121 = vld [vmem:[#allocation2 + $0x218] sm:$0xff]
    %v122 = vld [vmem:[#allocation2 + $0x220] sm:$0xff]
    %v123 = vld [vmem:[#allocation2 + $0x228] sm:$0xff]
    %v124 = vld [vmem:[#allocation2 + $0x230] sm:$0xff]
    %v125 = vld [vmem:[#allocation2 + $0x238] sm:$0xff]
    %v126 = vld [vmem:[#allocation2 + $0x240] sm:$0xff]
    %v127 = vld [vmem:[#allocation2 + $0x248] sm:$0xff]
    %v128 = vld [vmem:[#allocation2 + $0x250] sm:$0xff]
    %v129 = vld [vmem:[#allocation2 + $0x258] sm:$0xff]
    %v130 = vld [vmem:[#allocation2 + $0x260] sm:$0xff]
    %v131 = vld [vmem:[#allocation2 + $0x268] sm:$0xff]
    %v132 = vld [vmem:[#allocation2 + $0x270] sm:$0xff]
    %v133 = vld [vmem:[#allocation2 + $0x278] sm:$0xff]
    %v134 = vld [vmem:[#allocation2 + $0x280] sm:$0xff]
    %v135 = vld [vmem:[#allocation2 + $0x288] sm:$0xff]
    %v136 = vld [vmem:[#allocation2 + $0x290] sm:$0xff]
    %v137 = vld [vmem:[#allocation2 + $0x298] sm:$0xff]
    %v138 = vld [vmem:[#allocation2 + $0x2a0] sm:$0xff]
    %v139 = vld [vmem:[#allocation2 + $0x2a8] sm:$0xff]
    %v140 = vld [vmem:[#allocation2 + $0x2b0] sm:$0xff]
    %v141 = vld [vmem:[#allocation2 + $0x2b8] sm:$0xff]
    %v142 = vld [vmem:[#allocation2 + $0x2c0] sm:$0xff]
    %v143 = vld [vmem:[#allocation2 + $0x2c8] sm:$0xff]
    %v144 = vld [vmem:[#allocation2 + $0x2d0] sm:$0xff]
    %v145 = vld [vmem:[#allocation2 + $0x2d8] sm:$0xff]
    %v146 = vld [vmem:[#allocation2 + $0x2e0] sm:$0xff]
    %v147 = vld [vmem:[#allocation2 + $0x2e8] sm:$0xff]
    %v148 = vld [vmem:[#allocation2 + $0x2f0] sm:$0xff]
    %v149 = vld [vmem:[#allocation2 + $0x2f8] sm:$0xff]
    %v150 = vld [vmem:[#allocation2 + $0x300] sm:$0xff]
    %v151 = vld [vmem:[#allocation2 + $0x308] sm:$0xff]
    %v152 = vld [vmem:[#allocation2 + $0x310] sm:$0xff]
    %v153 = vld [vmem:[#allocation2 + $0x318] sm:$0xff]
    %v154 = vld [vmem:[#allocation2 + $0x320] sm:$0xff]
    %v155 = vld [vmem:[#allocation2 + $0x328] sm:$0xff]
    %v156 = vld [vmem:[#allocation2 + $0x330] sm:$0xff]
    %v157 = vld [vmem:[#allocation2 + $0x338] sm:$0xff]
    %v158 = vld [vmem:[#allocation2 + $0x340] sm:$0xff]
    %v159 = vld [vmem:[#allocation2 + $0x348] sm:$0xff]
    %v160 = vld [vmem:[#allocation2 + $0x350] sm:$0xff]
    %v161 = vld [vmem:[#allocation2 + $0x358] sm:$0xff]
    %v162 = vld [vmem:[#allocation2 + $0x360] sm:$0xff]
    %v163 = vld [vmem:[#allocation2 + $0x368] sm:$0xff]
    %v164 = vld [vmem:[#allocation2 + $0x370] sm:$0xff]
    %v165 = vld [vmem:[#allocation2 + $0x378] sm:$0xff]
    %v166 = vld [vmem:[#allocation2 + $0x380] sm:$0xff]
    %v167 = vld [vmem:[#allocation2 + $0x388] sm:$0xff]
    %v168 = vld [vmem:[#allocation2 + $0x390] sm:$0xff]
    %v169 = vld [vmem:[#allocation2 + $0x398] sm:$0xff]
    %v170 = vld [vmem:[#allocation2 + $0x3a0] sm:$0xff]
    %v171 = vld [vmem:[#allocation2 + $0x3a8] sm:$0xff]
    %v172 = vld [vmem:[#allocation2 + $0x3b0] sm:$0xff]
    %v173 = vld [vmem:[#allocation2 + $0x3b8] sm:$0xff]
    %v174 = vld [vmem:[#allocation2 + $0x3c0] sm:$0xff]
    %v175 = vld [vmem:[#allocation2 + $0x3c8] sm:$0xff]
    %v176 = vld [vmem:[#allocation2 + $0x3d0] sm:$0xff]
    %v177 = vld [vmem:[#allocation2 + $0x3d8] sm:$0xff]
    %v178 = vld [vmem:[#allocation2 + $0x3e0] sm:$0xff]
    %v179 = vld [vmem:[#allocation2 + $0x3e8] sm:$0xff]
    %v180 = vld [vmem:[#allocation2 + $0x3f0] sm:$0xff]
    %v181 = vld [vmem:[#allocation2 + $0x3f8] sm:$0xff]
    %v182 = vld [vmem:[#allocation2 + $0x400] sm:$0xff]
    %v183 = vld [vmem:[#allocation2 + $0x408] sm:$0xff]
    %v184 = vld [vmem:[#allocation2 + $0x410] sm:$0xff]
    %v185 = vld [vmem:[#allocation2 + $0x418] sm:$0xff]
    %v186 = vld [vmem:[#allocation2 + $0x420] sm:$0xff]
    %v187 = vld [vmem:[#allocation2 + $0x428] sm:$0xff]
    %v188 = vld [vmem:[#allocation2 + $0x430] sm:$0xff]
    %v189 = vld [vmem:[#allocation2 + $0x438] sm:$0xff]
    %v190 = vld [vmem:[#allocation2 + $0x440] sm:$0xff]
    %v191 = vld [vmem:[#allocation2 + $0x448] sm:$0xff]
    %v192 = vld [vmem:[#allocation2 + $0x450] sm:$0xff]
    %v193 = vld [vmem:[#allocation2 + $0x458] sm:$0xff]
    %v194 = vld [vmem:[#allocation2 + $0x460] sm:$0xff]
    %v195 = vld [vmem:[#allocation2 + $0x468] sm:$0xff]
    %v196 = vld [vmem:[#allocation2 + $0x470] sm:$0xff]
    %v197 = vld [vmem:[#allocation2 + $0x478] sm:$0xff]
    %v198 = vld [vmem:[#allocation2 + $0x480] sm:$0xff]
    %v199 = vld [vmem:[#allocation2 + $0x488] sm:$0xff]
    %v200 = vld [vmem:[#allocation2 + $0x490] sm:$0xff]
    %v201 = vld [vmem:[#allocation2 + $0x498] sm:$0xff]
    %v202 = vld [vmem:[#allocation2 + $0x4a0] sm:$0xff]
    %v203 = vld [vmem:[#allocation2 + $0x4a8] sm:$0xff]
    %v204 = vld [vmem:[#allocation2 + $0x4b0] sm:$0xff]
    %v205 = vld [vmem:[#allocation2 + $0x4b8] sm:$0xff]
    %v206 = vld [vmem:[#allocation2 + $0x4c0] sm:$0xff]
    %v207 = vld [vmem:[#allocation2 + $0x4c8] sm:$0xff]
    %v208 = vld [vmem:[#allocation2 + $0x4d0] sm:$0xff]
    %v209 = vld [vmem:[#allocation2 + $0x4d8] sm:$0xff]
    %v210 = vld [vmem:[#allocation2 + $0x4e0] sm:$0xff]
    %v211 = vld [vmem:[#allocation2 + $0x4e8] sm:$0xff]
    %v212 = vld [vmem:[#allocation2 + $0x4f0] sm:$0xff]
    %v213 = vld [vmem:[#allocation2 + $0x4f8] sm:$0xff]
    %v214 = vld [vmem:[#allocation2 + $0x500] sm:$0xff]
    %v215 = vld [vmem:[#allocation2 + $0x508] sm:$0xff]
    %v216 = vld [vmem:[#allocation2 + $0x510] sm:$0xff]
    %v217 = vld [vmem:[#allocation2 + $0x518] sm:$0xff]
    %v218 = vld [vmem:[#allocation2 + $0x520] sm:$0xff]
    %v219 = vld [vmem:[#allocation2 + $0x528] sm:$0xff]
    %v220 = vld [vmem:[#allocation2 + $0x530] sm:$0xff]
    %v221 = vld [vmem:[#allocation2 + $0x538] sm:$0xff]
    %v222 = vld [vmem:[#allocation2 + $0x540] sm:$0xff]
    %v223 = vld [vmem:[#allocation2 + $0x548] sm:$0xff]
    %v224 = vld [vmem:[#allocation2 + $0x550] sm:$0xff]
    %v225 = vld [vmem:[#allocation2 + $0x558] sm:$0xff]
    %v226 = vld [vmem:[#allocation2 + $0x560] sm:$0xff]
    %v227 = vld [vmem:[#allocation2 + $0x568] sm:$0xff]
    %v228 = vld [vmem:[#allocation2 + $0x570] sm:$0xff]
    %v229 = vld [vmem:[#allocation2 + $0x578] sm:$0xff]
    %v230 = vld [vmem:[#allocation2 + $0x580] sm:$0xff]
    %v231 = vld [vmem:[#allocation2 + $0x588] sm:$0xff]
    %v232 = vld [vmem:[#allocation2 + $0x590] sm:$0xff]
    %v233 = vld [vmem:[#allocation2 + $0x598] sm:$0xff]
    %v234 = vld [vmem:[#allocation2 + $0x5a0] sm:$0xff]
    %v235 = vld [vmem:[#allocation2 + $0x5a8] sm:$0xff]
    %v236 = vld [vmem:[#allocation2 + $0x5b0] sm:$0xff]
    %v237 = vld [vmem:[#allocation2 + $0x5b8] sm:$0xff]
    %v238 = vld [vmem:[#allocation2 + $0x5c0] sm:$0xff]
    %v239 = vld [vmem:[#allocation2 + $0x5c8] sm:$0xff]
    %v240 = vld [vmem:[#allocation2 + $0x5d0] sm:$0xff]
    %v241 = vld [vmem:[#allocation2 + $0x5d8] sm:$0xff]
    %v242 = vld [vmem:[#allocation2 + $0x5e0] sm:$0xff]
    %v243 = vld [vmem:[#allocation2 + $0x5e8] sm:$0xff]
    %v244 = vld [vmem:[#allocation2 + $0x5f0] sm:$0xff]
    %v245 = vld [vmem:[#allocation2 + $0x5f8] sm:$0xff]
    %v246 = vld [vmem:[#allocation2 + $0x600] sm:$0xff]
    %v247 = vld [vmem:[#allocation2 + $0x608] sm:$0xff]
    %v248 = vld [vmem:[#allocation2 + $0x610] sm:$0xff]
    %v249 = vld [vmem:[#allocation2 + $0x618] sm:$0xff]
    %v250 = vld [vmem:[#allocation2 + $0x620] sm:$0xff]
    %v251 = vld [vmem:[#allocation2 + $0x628] sm:$0xff]
    %v252 = vld [vmem:[#allocation2 + $0x630] sm:$0xff]
    %v253 = vld [vmem:[#allocation2 + $0x638] sm:$0xff]
    %v254 = vld [vmem:[#allocation2 + $0x640] sm:$0xff]
    %v255 = vld [vmem:[#allocation2 + $0x648] sm:$0xff]
    %v256 = vld [vmem:[#allocation2 + $0x650] sm:$0xff]
    %v257 = vld [vmem:[#allocation2 + $0x658] sm:$0xff]
    %v258 = vld [vmem:[#allocation2 + $0x660] sm:$0xff]
    %v259 = vld [vmem:[#allocation2 + $0x668] sm:$0xff]
    %v260 = vld [vmem:[#allocation2 + $0x670] sm:$0xff]
    %v261 = vld [vmem:[#allocation2 + $0x678] sm:$0xff]
    %v262 = vld [vmem:[#allocation2 + $0x680] sm:$0xff]
    %v263 = vld [vmem:[#allocation2 + $0x688] sm:$0xff]
    %v264 = vld [vmem:[#allocation2 + $0x690] sm:$0xff]
    %v265 = vld [vmem:[#allocation2 + $0x698] sm:$0xff]
    %v266 = vld [vmem:[#allocation2 + $0x6a0] sm:$0xff]
    %v267 = vld [vmem:[#allocation2 + $0x6a8] sm:$0xff]
    %v268 = vld [vmem:[#allocation2 + $0x6b0] sm:$0xff]
    %v269 = vld [vmem:[#allocation2 + $0x6b8] sm:$0xff]
    %v270 = vld [vmem:[#allocation2 + $0x6c0] sm:$0xff]
    %v271 = vld [vmem:[#allocation2 + $0x6c8] sm:$0xff]
    %v272 = vld [vmem:[#allocation2 + $0x6d0] sm:$0xff]
    %v273 = vld [vmem:[#allocation2 + $0x6d8] sm:$0xff]
    %v274 = vld [vmem:[#allocation2 + $0x6e0] sm:$0xff]
    %v275 = vld [vmem:[#allocation2 + $0x6e8] sm:$0xff]
    %v276 = vld [vmem:[#allocation2 + $0x6f0] sm:$0xff]
    %v277 = vld [vmem:[#allocation2 + $0x6f8] sm:$0xff]
    %v278 = vld [vmem:[#allocation2 + $0x700] sm:$0xff]
    %v279 = vld [vmem:[#allocation2 + $0x708] sm:$0xff]
    %v280 = vld [vmem:[#allocation2 + $0x710] sm:$0xff]
    %v281 = vld [vmem:[#allocation2 + $0x718] sm:$0xff]
    %v282 = vld [vmem:[#allocation2 + $0x720] sm:$0xff]
    %v283 = vld [vmem:[#allocation2 + $0x728] sm:$0xff]
    %v284 = vld [vmem:[#allocation2 + $0x730] sm:$0xff]
    %v285 = vld [vmem:[#allocation2 + $0x738] sm:$0xff]
    %v286 = vld [vmem:[#allocation2 + $0x740] sm:$0xff]
    %v287 = vld [vmem:[#allocation2 + $0x748] sm:$0xff]
    %v288 = vld [vmem:[#allocation2 + $0x750] sm:$0xff]
    %v289 = vld [vmem:[#allocation2 + $0x758] sm:$0xff]
    %v290 = vld [vmem:[#allocation2 + $0x760] sm:$0xff]
    %v291 = vld [vmem:[#allocation2 + $0x768] sm:$0xff]
    %v292 = vld [vmem:[#allocation2 + $0x770] sm:$0xff]
    %v293 = vld [vmem:[#allocation2 + $0x778] sm:$0xff]
    %v294 = vld [vmem:[#allocation2 + $0x780] sm:$0xff]
    %v295 = vld [vmem:[#allocation2 + $0x788] sm:$0xff]
    %v296 = vld [vmem:[#allocation2 + $0x790] sm:$0xff]
    %v297 = vld [vmem:[#allocation2 + $0x798] sm:$0xff]
    %v298 = vld [vmem:[#allocation2 + $0x7a0] sm:$0xff]
    %v299 = vld [vmem:[#allocation2 + $0x7a8] sm:$0xff]
    %v300 = vld [vmem:[#allocation2 + $0x7b0] sm:$0xff]
    %v301 = vld [vmem:[#allocation2 + $0x7b8] sm:$0xff]
    %v302 = vld [vmem:[#allocation2 + $0x7c0] sm:$0xff]
    %v303 = vld [vmem:[#allocation2 + $0x7c8] sm:$0xff]
    %v304 = vld [vmem:[#allocation2 + $0x7d0] sm:$0xff]
    %v305 = vld [vmem:[#allocation2 + $0x7d8] sm:$0xff]
    %v306 = vld [vmem:[#allocation2 + $0x7e0] sm:$0xff]
    %v307 = vld [vmem:[#allocation2 + $0x7e8] sm:$0xff]
    %v308 = vld [vmem:[#allocation2 + $0x7f0] sm:$0xff]
    %v309 = vld [vmem:[#allocation2 + $0x7f8] sm:$0xff]
    %v310 = vld [vmem:[#allocation2 + $0x800] sm:$0xff]
    %v311 = vld [vmem:[#allocation2 + $0x808] sm:$0xff]
    %v312 = vld [vmem:[#allocation2 + $0x810] sm:$0xff]
    %v313 = vld [vmem:[#allocation2 + $0x818] sm:$0xff]
    %v314 = vld [vmem:[#allocation2 + $0x820] sm:$0xff]
    %v315 = vld [vmem:[#allocation2 + $0x828] sm:$0xff]
    %v316 = vld [vmem:[#allocation2 + $0x830] sm:$0xff]
    %v317 = vld [vmem:[#allocation2 + $0x838] sm:$0xff]
    %v318 = vld [vmem:[#allocation2 + $0x840] sm:$0xff]
    %v319 = vld [vmem:[#allocation2 + $0x848] sm:$0xff]
    %v320 = vld [vmem:[#allocation2 + $0x850] sm:$0xff]
    %v321 = vld [vmem:[#allocation2 + $0x858] sm:$0xff]
    %v322 = vld [vmem:[#allocation2 + $0x860] sm:$0xff]
    %v323 = vld [vmem:[#allocation2 + $0x868] sm:$0xff]
    %v324 = vld [vmem:[#allocation2 + $0x870] sm:$0xff]
    %v325 = vld [vmem:[#allocation2 + $0x878] sm:$0xff]
    %v326 = vld [vmem:[#allocation2 + $0x880] sm:$0xff]
    %v327 = vld [vmem:[#allocation2 + $0x888] sm:$0xff]
    %v328 = vld [vmem:[#allocation2 + $0x890] sm:$0xff]
    %v329 = vld [vmem:[#allocation2 + $0x898] sm:$0xff]
    %v330 = vld [vmem:[#allocation2 + $0x8a0] sm:$0xff]
    %v331 = vld [vmem:[#allocation2 + $0x8a8] sm:$0xff]
    %v332 = vld [vmem:[#allocation2 + $0x8b0] sm:$0xff]
    %v333 = vld [vmem:[#allocation2 + $0x8b8] sm:$0xff]
    %v334 = vld [vmem:[#allocation2 + $0x8c0] sm:$0xff]
    %v335 = vld [vmem:[#allocation2 + $0x8c8] sm:$0xff]
    %v336 = vld [vmem:[#allocation2 + $0x8d0] sm:$0xff]
    %v337 = vld [vmem:[#allocation2 + $0x8d8] sm:$0xff]
    %v338 = vld [vmem:[#allocation2 + $0x8e0] sm:$0xff]
    %v339 = vld [vmem:[#allocation2 + $0x8e8] sm:$0xff]
    %v340 = vld [vmem:[#allocation2 + $0x8f0] sm:$0xff]
    %v341 = vld [vmem:[#allocation2 + $0x8f8] sm:$0xff]
    %v342 = vld [vmem:[#allocation2 + $0x900] sm:$0xff]
    %v343 = vld [vmem:[#allocation2 + $0x908] sm:$0xff]
    %v344 = vld [vmem:[#allocation2 + $0x910] sm:$0xff]
    %v345 = vld [vmem:[#allocation2 + $0x918] sm:$0xff]
    %v346 = vld [vmem:[#allocation2 + $0x920] sm:$0xff]
    %v347 = vld [vmem:[#allocation2 + $0x928] sm:$0xff]
    %v348 = vld [vmem:[#allocation2 + $0x930] sm:$0xff]
    %v349 = vld [vmem:[#allocation2 + $0x938] sm:$0xff]
    %v350 = vld [vmem:[#allocation2 + $0x940] sm:$0xff]
    %v351 = vld [vmem:[#allocation2 + $0x948] sm:$0xff]
    %v352 = vld [vmem:[#allocation2 + $0x950] sm:$0xff]
    %v353 = vld [vmem:[#allocation2 + $0x958] sm:$0xff]
    %v354 = vld [vmem:[#allocation2 + $0x960] sm:$0xff]
    %v355 = vld [vmem:[#allocation2 + $0x968] sm:$0xff]
    %v356 = vld [vmem:[#allocation2 + $0x970] sm:$0xff]
    %v357 = vld [vmem:[#allocation2 + $0x978] sm:$0xff]
    %v358 = vld [vmem:[#allocation2 + $0x980] sm:$0xff]
    %v359 = vld [vmem:[#allocation2 + $0x988] sm:$0xff]
    %v360 = vld [vmem:[#allocation2 + $0x990] sm:$0xff]
    %v361 = vld [vmem:[#allocation2 + $0x998] sm:$0xff]
    %v362 = vld [vmem:[#allocation2 + $0x9a0] sm:$0xff]
    %v363 = vld [vmem:[#allocation2 + $0x9a8] sm:$0xff]
    %v364 = vld [vmem:[#allocation2 + $0x9b0] sm:$0xff]
    %v365 = vld [vmem:[#allocation2 + $0x9b8] sm:$0xff]
    %v366 = vld [vmem:[#allocation2 + $0x9c0] sm:$0xff]
    %v367 = vld [vmem:[#allocation2 + $0x9c8] sm:$0xff]
    %v368 = vld [vmem:[#allocation2 + $0x9d0] sm:$0xff]
    %v369 = vld [vmem:[#allocation2 + $0x9d8] sm:$0xff]
    %v370 = vld [vmem:[#allocation2 + $0x9e0] sm:$0xff]
    %v371 = vld [vmem:[#allocation2 + $0x9e8] sm:$0xff]
    %v372 = vld [vmem:[#allocation2 + $0x9f0] sm:$0xff]
    %v373 = vld [vmem:[#allocation2 + $0x9f8] sm:$0xff]
    %v374 = vld [vmem:[#allocation2 + $0xa00] sm:$0xff]
    %v375 = vld [vmem:[#allocation2 + $0xa08] sm:$0xff]
    %v376 = vld [vmem:[#allocation2 + $0xa10] sm:$0xff]
    %v377 = vld [vmem:[#allocation2 + $0xa18] sm:$0xff]
    %v378 = vld [vmem:[#allocation2 + $0xa20] sm:$0xff]
    %v379 = vld [vmem:[#allocation2 + $0xa28] sm:$0xff]
    %v380 = vld [vmem:[#allocation2 + $0xa30] sm:$0xff]
    %v381 = vld [vmem:[#allocation2 + $0xa38] sm:$0xff]
    %v382 = vld [vmem:[#allocation2 + $0xa40] sm:$0xff]
    %v383 = vld [vmem:[#allocation2 + $0xa48] sm:$0xff]
    %v384 = vld [vmem:[#allocation2 + $0xa50] sm:$0xff]
    %v385 = vld [vmem:[#allocation2 + $0xa58] sm:$0xff]
    %v386 = vld [vmem:[#allocation2 + $0xa60] sm:$0xff]
    %v387 = vld [vmem:[#allocation2 + $0xa68] sm:$0xff]
    %v388 = vld [vmem:[#allocation2 + $0xa70] sm:$0xff]
    %v389 = vld [vmem:[#allocation2 + $0xa78] sm:$0xff]
    %v390 = vld [vmem:[#allocation2 + $0xa80] sm:$0xff]
    %v391 = vld [vmem:[#allocation2 + $0xa88] sm:$0xff]
    %v392 = vld [vmem:[#allocation2 + $0xa90] sm:$0xff]
    %v393 = vld [vmem:[#allocation2 + $0xa98] sm:$0xff]
    %v394 = vld [vmem:[#allocation2 + $0xaa0] sm:$0xff]
    %v395 = vld [vmem:[#allocation2 + $0xaa8] sm:$0xff]
    %v396 = vld [vmem:[#allocation2 + $0xab0] sm:$0xff]
    %v397 = vld [vmem:[#allocation2 + $0xab8] sm:$0xff]
    %v398 = vld [vmem:[#allocation2 + $0xac0] sm:$0xff]
    %v399 = vld [vmem:[#allocation2 + $0xac8] sm:$0xff]
    %v400 = vld [vmem:[#allocation2 + $0xad0] sm:$0xff]
    %v401 = vld [vmem:[#allocation2 + $0xad8] sm:$0xff]
    %v402 = vld [vmem:[#allocation2 + $0xae0] sm:$0xff]
    %v403 = vld [vmem:[#allocation2 + $0xae8] sm:$0xff]
    %v404 = vld [vmem:[#allocation2 + $0xaf0] sm:$0xff]
    %v405 = vld [vmem:[#allocation2 + $0xaf8] sm:$0xff]
    %v406 = vld [vmem:[#allocation2 + $0xb00] sm:$0xff]
    %v407 = vld [vmem:[#allocation2 + $0xb08] sm:$0xff]
    %v408 = vld [vmem:[#allocation2 + $0xb10] sm:$0xff]
    %v409 = vld [vmem:[#allocation2 + $0xb18] sm:$0xff]
    %v410 = vld [vmem:[#allocation2 + $0xb20] sm:$0xff]
    %v411 = vld [vmem:[#allocation2 + $0xb28] sm:$0xff]
    %v412 = vld [vmem:[#allocation2 + $0xb30] sm:$0xff]
    %v413 = vld [vmem:[#allocation2 + $0xb38] sm:$0xff]
    %v414 = vld [vmem:[#allocation2 + $0xb40] sm:$0xff]
    %v415 = vld [vmem:[#allocation2 + $0xb48] sm:$0xff]
    %v416 = vld [vmem:[#allocation2 + $0xb50] sm:$0xff]
    %v417 = vld [vmem:[#allocation2 + $0xb58] sm:$0xff]
    %v418 = vld [vmem:[#allocation2 + $0xb60] sm:$0xff]
    %v419 = vld [vmem:[#allocation2 + $0xb68] sm:$0xff]
    %v420 = vld [vmem:[#allocation2 + $0xb70] sm:$0xff]
    %v421 = vld [vmem:[#allocation2 + $0xb78] sm:$0xff]
    %v422 = vld [vmem:[#allocation2 + $0xb80] sm:$0xff]
    %v423 = vld [vmem:[#allocation2 + $0xb88] sm:$0xff]
    %v424 = vld [vmem:[#allocation2 + $0xb90] sm:$0xff]
    %v425 = vld [vmem:[#allocation2 + $0xb98] sm:$0xff]
    %v426 = vld [vmem:[#allocation2 + $0xba0] sm:$0xff]
    %v427 = vld [vmem:[#allocation2 + $0xba8] sm:$0xff]
    %v428 = vld [vmem:[#allocation2 + $0xbb0] sm:$0xff]
    %v429 = vld [vmem:[#allocation2 + $0xbb8] sm:$0xff]
    %v430 = vld [vmem:[#allocation2 + $0xbc0] sm:$0xff]
    %v431 = vld [vmem:[#allocation2 + $0xbc8] sm:$0xff]
    %v432 = vadd.f32 %v54, %v55
    %v433 = vadd.f32 %v432, %v56
    %v434 = vadd.f32 %v433, %v57
    %v435 = vadd.f32 %v434, %v58
    %v436 = vadd.f32 %v435, %v59
    %vm437 = vcmask 130048
    %v438 = vsel %vm437, %v60, 0.0
    %v439 = vadd.f32 %v436, %v438
    %440 = vadd.xlane.f32.xlu0 %v439
    %v441 = vpop.xlane.xlu0 %440
    %v442 = vadd.f32 %v61, %v62
    %v443 = vadd.f32 %v442, %v63
    %v444 = vadd.f32 %v443, %v64
    %v445 = vadd.f32 %v444, %v65
    %v446 = vadd.f32 %v445, %v66
    %v447 = vsel %vm437, %v67, 0.0
    %v448 = vadd.f32 %v446, %v447
    %449 = vadd.xlane.f32.xlu0 %v448
    %v450 = vpop.xlane.xlu0 %449
    %v451 = vadd.f32 %v68, %v69
    %v452 = vadd.f32 %v451, %v70
    %v453 = vadd.f32 %v452, %v71
    %v454 = vadd.f32 %v453, %v72
    %v455 = vadd.f32 %v454, %v73
    %v456 = vsel %vm437, %v74, 0.0
    %v457 = vadd.f32 %v455, %v456
    %458 = vadd.xlane.f32.xlu0 %v457
    %v459 = vpop.xlane.xlu0 %458
    %v460 = vadd.f32 %v75, %v76
    %v461 = vadd.f32 %v460, %v77
    %v462 = vadd.f32 %v461, %v78
    %v463 = vadd.f32 %v462, %v79
    %v464 = vadd.f32 %v463, %v80
    %v465 = vsel %vm437, %v81, 0.0
    %v466 = vadd.f32 %v464, %v465
    %467 = vadd.xlane.f32.xlu0 %v466
    %v468 = vpop.xlane.xlu0 %467
    %v469 = vadd.f32 %v82, %v83
    %v470 = vadd.f32 %v469, %v84
    %v471 = vadd.f32 %v470, %v85
    %v472 = vadd.f32 %v471, %v86
    %v473 = vadd.f32 %v472, %v87
    %v474 = vsel %vm437, %v88, 0.0
    %v475 = vadd.f32 %v473, %v474
    %476 = vadd.xlane.f32.xlu0 %v475
    %v477 = vpop.xlane.xlu0 %476
    %v478 = vadd.f32 %v89, %v90
    %v479 = vadd.f32 %v478, %v91
    %v480 = vadd.f32 %v479, %v92
    %v481 = vadd.f32 %v480, %v93
    %v482 = vadd.f32 %v481, %v94
    %v483 = vsel %vm437, %v95, 0.0
    %v484 = vadd.f32 %v482, %v483
    %485 = vadd.xlane.f32.xlu0 %v484
    %v486 = vpop.xlane.xlu0 %485
    %v487 = vadd.f32 %v96, %v97
    %v488 = vadd.f32 %v487, %v98
    %v489 = vadd.f32 %v488, %v99
    %v490 = vadd.f32 %v489, %v100
    %v491 = vadd.f32 %v490, %v101
    %v492 = vsel %vm437, %v102, 0.0
    %v493 = vadd.f32 %v491, %v492
    %494 = vadd.xlane.f32.xlu0 %v493
    %v495 = vpop.xlane.xlu0 %494
    %v496 = vadd.f32 %v103, %v104
    %v497 = vadd.f32 %v496, %v105
    %v498 = vadd.f32 %v497, %v106
    %v499 = vadd.f32 %v498, %v107
    %v500 = vadd.f32 %v499, %v108
    %v501 = vsel %vm437, %v109, 0.0
    %v502 = vadd.f32 %v500, %v501
    %503 = vadd.xlane.f32.xlu0 %v502
    %v504 = vpop.xlane.xlu0 %503
    %v505 = vadd.f32 %v110, %v111
    %v506 = vadd.f32 %v505, %v112
    %v507 = vadd.f32 %v506, %v113
    %v508 = vadd.f32 %v507, %v114
    %v509 = vadd.f32 %v508, %v115
    %v510 = vsel %vm437, %v116, 0.0
    %v511 = vadd.f32 %v509, %v510
    %512 = vadd.xlane.f32.xlu0 %v511
    %v513 = vpop.xlane.xlu0 %512
    %v514 = vadd.f32 %v117, %v118
    %v515 = vadd.f32 %v514, %v119
    %v516 = vadd.f32 %v515, %v120
    %v517 = vadd.f32 %v516, %v121
    %v518 = vadd.f32 %v517, %v122
    %v519 = vsel %vm437, %v123, 0.0
    %v520 = vadd.f32 %v518, %v519
    %521 = vadd.xlane.f32.xlu0 %v520
    %v522 = vpop.xlane.xlu0 %521
    %v523 = vadd.f32 %v124, %v125
    %v524 = vadd.f32 %v523, %v126
    %v525 = vadd.f32 %v524, %v127
    %v526 = vadd.f32 %v525, %v128
    %v527 = vadd.f32 %v526, %v129
    %v528 = vsel %vm437, %v130, 0.0
    %v529 = vadd.f32 %v527, %v528
    %530 = vadd.xlane.f32.xlu0 %v529
    %v531 = vpop.xlane.xlu0 %530
    %v532 = vadd.f32 %v131, %v132
    %v533 = vadd.f32 %v532, %v133
    %v534 = vadd.f32 %v533, %v134
    %v535 = vadd.f32 %v534, %v135
    %v536 = vadd.f32 %v535, %v136
    %v537 = vsel %vm437, %v137, 0.0
    %v538 = vadd.f32 %v536, %v537
    %539 = vadd.xlane.f32.xlu0 %v538
    %v540 = vpop.xlane.xlu0 %539
    %v541 = vadd.f32 %v138, %v139
    %v542 = vadd.f32 %v541, %v140
    %v543 = vadd.f32 %v542, %v141
    %v544 = vadd.f32 %v543, %v142
    %v545 = vadd.f32 %v544, %v143
    %v546 = vsel %vm437, %v144, 0.0
    %v547 = vadd.f32 %v545, %v546
    %548 = vadd.xlane.f32.xlu0 %v547
    %v549 = vpop.xlane.xlu0 %548
    %v550 = vadd.f32 %v145, %v146
    %v551 = vadd.f32 %v550, %v147
    %v552 = vadd.f32 %v551, %v148
    %v553 = vadd.f32 %v552, %v149
    %v554 = vadd.f32 %v553, %v150
    %v555 = vsel %vm437, %v151, 0.0
    %v556 = vadd.f32 %v554, %v555
    %557 = vadd.xlane.f32.xlu0 %v556
    %v558 = vpop.xlane.xlu0 %557
    %v559 = vadd.f32 %v152, %v153
    %v560 = vadd.f32 %v559, %v154
    %v561 = vadd.f32 %v560, %v155
    %v562 = vadd.f32 %v561, %v156
    %v563 = vadd.f32 %v562, %v157
    %v564 = vsel %vm437, %v158, 0.0
    %v565 = vadd.f32 %v563, %v564
    %566 = vadd.xlane.f32.xlu0 %v565
    %v567 = vpop.xlane.xlu0 %566
    %v568 = vadd.f32 %v159, %v160
    %v569 = vadd.f32 %v568, %v161
    %v570 = vadd.f32 %v569, %v162
    %v571 = vadd.f32 %v570, %v163
    %v572 = vadd.f32 %v571, %v164
    %v573 = vsel %vm437, %v165, 0.0
    %v574 = vadd.f32 %v572, %v573
    %575 = vadd.xlane.f32.xlu0 %v574
    %v576 = vpop.xlane.xlu0 %575
    %v577 = vadd.f32 %v166, %v167
    %v578 = vadd.f32 %v577, %v168
    %v579 = vadd.f32 %v578, %v169
    %v580 = vadd.f32 %v579, %v170
    %v581 = vadd.f32 %v580, %v171
    %v582 = vsel %vm437, %v172, 0.0
    %v583 = vadd.f32 %v581, %v582
    %584 = vadd.xlane.f32.xlu0 %v583
    %v585 = vpop.xlane.xlu0 %584
    %v586 = vadd.f32 %v173, %v174
    %v587 = vadd.f32 %v586, %v175
    %v588 = vadd.f32 %v587, %v176
    %v589 = vadd.f32 %v588, %v177
    %v590 = vadd.f32 %v589, %v178
    %v591 = vsel %vm437, %v179, 0.0
    %v592 = vadd.f32 %v590, %v591
    %593 = vadd.xlane.f32.xlu0 %v592
    %v594 = vpop.xlane.xlu0 %593
    %v595 = vadd.f32 %v180, %v181
    %v596 = vadd.f32 %v595, %v182
    %v597 = vadd.f32 %v596, %v183
    %v598 = vadd.f32 %v597, %v184
    %v599 = vadd.f32 %v598, %v185
    %v600 = vsel %vm437, %v186, 0.0
    %v601 = vadd.f32 %v599, %v600
    %602 = vadd.xlane.f32.xlu0 %v601
    %v603 = vpop.xlane.xlu0 %602
    %v604 = vadd.f32 %v187, %v188
    %v605 = vadd.f32 %v604, %v189
    %v606 = vadd.f32 %v605, %v190
    %v607 = vadd.f32 %v606, %v191
    %v608 = vadd.f32 %v607, %v192
    %v609 = vsel %vm437, %v193, 0.0
    %v610 = vadd.f32 %v608, %v609
    %611 = vadd.xlane.f32.xlu0 %v610
    %v612 = vpop.xlane.xlu0 %611
    %v613 = vadd.f32 %v194, %v195
    %v614 = vadd.f32 %v613, %v196
    %v615 = vadd.f32 %v614, %v197
    %v616 = vadd.f32 %v615, %v198
    %v617 = vadd.f32 %v616, %v199
    %v618 = vsel %vm437, %v200, 0.0
    %v619 = vadd.f32 %v617, %v618
    %620 = vadd.xlane.f32.xlu0 %v619
    %v621 = vpop.xlane.xlu0 %620
    %v622 = vadd.f32 %v201, %v202
    %v623 = vadd.f32 %v622, %v203
    %v624 = vadd.f32 %v623, %v204
    %v625 = vadd.f32 %v624, %v205
    %v626 = vadd.f32 %v625, %v206
    %v627 = vsel %vm437, %v207, 0.0
    %v628 = vadd.f32 %v626, %v627
    %629 = vadd.xlane.f32.xlu0 %v628
    %v630 = vpop.xlane.xlu0 %629
    %v631 = vadd.f32 %v208, %v209
    %v632 = vadd.f32 %v631, %v210
    %v633 = vadd.f32 %v632, %v211
    %v634 = vadd.f32 %v633, %v212
    %v635 = vadd.f32 %v634, %v213
    %v636 = vsel %vm437, %v214, 0.0
    %v637 = vadd.f32 %v635, %v636
    %638 = vadd.xlane.f32.xlu0 %v637
    %v639 = vpop.xlane.xlu0 %638
    %v640 = vadd.f32 %v215, %v216
    %v641 = vadd.f32 %v640, %v217
    %v642 = vadd.f32 %v641, %v218
    %v643 = vadd.f32 %v642, %v219
    %v644 = vadd.f32 %v643, %v220
    %v645 = vsel %vm437, %v221, 0.0
    %v646 = vadd.f32 %v644, %v645
    %647 = vadd.xlane.f32.xlu0 %v646
    %v648 = vpop.xlane.xlu0 %647
    %v649 = vadd.f32 %v222, %v223
    %v650 = vadd.f32 %v649, %v224
    %v651 = vadd.f32 %v650, %v225
    %v652 = vadd.f32 %v651, %v226
    %v653 = vadd.f32 %v652, %v227
    %v654 = vsel %vm437, %v228, 0.0
    %v655 = vadd.f32 %v653, %v654
    %656 = vadd.xlane.f32.xlu0 %v655
    %v657 = vpop.xlane.xlu0 %656
    %v658 = vadd.f32 %v229, %v230
    %v659 = vadd.f32 %v658, %v231
    %v660 = vadd.f32 %v659, %v232
    %v661 = vadd.f32 %v660, %v233
    %v662 = vadd.f32 %v661, %v234
    %v663 = vsel %vm437, %v235, 0.0
    %v664 = vadd.f32 %v662, %v663
    %665 = vadd.xlane.f32.xlu0 %v664
    %v666 = vpop.xlane.xlu0 %665
    %v667 = vadd.f32 %v236, %v237
    %v668 = vadd.f32 %v667, %v238
    %v669 = vadd.f32 %v668, %v239
    %v670 = vadd.f32 %v669, %v240
    %v671 = vadd.f32 %v670, %v241
    %v672 = vsel %vm437, %v242, 0.0
    %v673 = vadd.f32 %v671, %v672
    %674 = vadd.xlane.f32.xlu0 %v673
    %v675 = vpop.xlane.xlu0 %674
    %v676 = vadd.f32 %v243, %v244
    %v677 = vadd.f32 %v676, %v245
    %v678 = vadd.f32 %v677, %v246
    %v679 = vadd.f32 %v678, %v247
    %v680 = vadd.f32 %v679, %v248
    %v681 = vsel %vm437, %v249, 0.0
    %v682 = vadd.f32 %v680, %v681
    %683 = vadd.xlane.f32.xlu0 %v682
    %v684 = vpop.xlane.xlu0 %683
    %v685 = vadd.f32 %v250, %v251
    %v686 = vadd.f32 %v685, %v252
    %v687 = vadd.f32 %v686, %v253
    %v688 = vadd.f32 %v687, %v254
    %v689 = vadd.f32 %v688, %v255
    %v690 = vsel %vm437, %v256, 0.0
    %v691 = vadd.f32 %v689, %v690
    %692 = vadd.xlane.f32.xlu0 %v691
    %v693 = vpop.xlane.xlu0 %692
    %v694 = vadd.f32 %v257, %v258
    %v695 = vadd.f32 %v694, %v259
    %v696 = vadd.f32 %v695, %v260
    %v697 = vadd.f32 %v696, %v261
    %v698 = vadd.f32 %v697, %v262
    %v699 = vsel %vm437, %v263, 0.0
    %v700 = vadd.f32 %v698, %v699
    %701 = vadd.xlane.f32.xlu0 %v700
    %v702 = vpop.xlane.xlu0 %701
    %v703 = vadd.f32 %v264, %v265
    %v704 = vadd.f32 %v703, %v266
    %v705 = vadd.f32 %v704, %v267
    %v706 = vadd.f32 %v705, %v268
    %v707 = vadd.f32 %v706, %v269
    %v708 = vsel %vm437, %v270, 0.0
    %v709 = vadd.f32 %v707, %v708
    %710 = vadd.xlane.f32.xlu0 %v709
    %v711 = vpop.xlane.xlu0 %710
    %v712 = vadd.f32 %v271, %v272
    %v713 = vadd.f32 %v712, %v273
    %v714 = vadd.f32 %v713, %v274
    %v715 = vadd.f32 %v714, %v275
    %v716 = vadd.f32 %v715, %v276
    %v717 = vsel %vm437, %v277, 0.0
    %v718 = vadd.f32 %v716, %v717
    %719 = vadd.xlane.f32.xlu0 %v718
    %v720 = vpop.xlane.xlu0 %719
    %v721 = vadd.f32 %v278, %v279
    %v722 = vadd.f32 %v721, %v280
    %v723 = vadd.f32 %v722, %v281
    %v724 = vadd.f32 %v723, %v282
    %v725 = vadd.f32 %v724, %v283
    %v726 = vsel %vm437, %v284, 0.0
    %v727 = vadd.f32 %v725, %v726
    %728 = vadd.xlane.f32.xlu0 %v727
    %v729 = vpop.xlane.xlu0 %728
    %v730 = vadd.f32 %v285, %v286
    %v731 = vadd.f32 %v730, %v287
    %v732 = vadd.f32 %v731, %v288
    %v733 = vadd.f32 %v732, %v289
    %v734 = vadd.f32 %v733, %v290
    %v735 = vsel %vm437, %v291, 0.0
    %v736 = vadd.f32 %v734, %v735
    %737 = vadd.xlane.f32.xlu0 %v736
    %v738 = vpop.xlane.xlu0 %737
    %v739 = vadd.f32 %v292, %v293
    %v740 = vadd.f32 %v739, %v294
    %v741 = vadd.f32 %v740, %v295
    %v742 = vadd.f32 %v741, %v296
    %v743 = vadd.f32 %v742, %v297
    %v744 = vsel %vm437, %v298, 0.0
    %v745 = vadd.f32 %v743, %v744
    %746 = vadd.xlane.f32.xlu0 %v745
    %v747 = vpop.xlane.xlu0 %746
    %v748 = vadd.f32 %v299, %v300
    %v749 = vadd.f32 %v748, %v301
    %v750 = vadd.f32 %v749, %v302
    %v751 = vadd.f32 %v750, %v303
    %v752 = vadd.f32 %v751, %v304
    %v753 = vsel %vm437, %v305, 0.0
    %v754 = vadd.f32 %v752, %v753
    %755 = vadd.xlane.f32.xlu0 %v754
    %v756 = vpop.xlane.xlu0 %755
    %v757 = vadd.f32 %v306, %v307
    %v758 = vadd.f32 %v757, %v308
    %v759 = vadd.f32 %v758, %v309
    %v760 = vadd.f32 %v759, %v310
    %v761 = vadd.f32 %v760, %v311
    %v762 = vsel %vm437, %v312, 0.0
    %v763 = vadd.f32 %v761, %v762
    %764 = vadd.xlane.f32.xlu0 %v763
    %v765 = vpop.xlane.xlu0 %764
    %v766 = vadd.f32 %v313, %v314
    %v767 = vadd.f32 %v766, %v315
    %v768 = vadd.f32 %v767, %v316
    %v769 = vadd.f32 %v768, %v317
    %v770 = vadd.f32 %v769, %v318
    %v771 = vsel %vm437, %v319, 0.0
    %v772 = vadd.f32 %v770, %v771
    %773 = vadd.xlane.f32.xlu0 %v772
    %v774 = vpop.xlane.xlu0 %773
    %v775 = vadd.f32 %v320, %v321
    %v776 = vadd.f32 %v775, %v322
    %v777 = vadd.f32 %v776, %v323
    %v778 = vadd.f32 %v777, %v324
    %v779 = vadd.f32 %v778, %v325
    %v780 = vsel %vm437, %v326, 0.0
    %v781 = vadd.f32 %v779, %v780
    %782 = vadd.xlane.f32.xlu0 %v781
    %v783 = vpop.xlane.xlu0 %782
    %v784 = vadd.f32 %v327, %v328
    %v785 = vadd.f32 %v784, %v329
    %v786 = vadd.f32 %v785, %v330
    %v787 = vadd.f32 %v786, %v331
    %v788 = vadd.f32 %v787, %v332
    %v789 = vsel %vm437, %v333, 0.0
    %v790 = vadd.f32 %v788, %v789
    %791 = vadd.xlane.f32.xlu0 %v790
    %v792 = vpop.xlane.xlu0 %791
    %v793 = vadd.f32 %v334, %v335
    %v794 = vadd.f32 %v793, %v336
    %v795 = vadd.f32 %v794, %v337
    %v796 = vadd.f32 %v795, %v338
    %v797 = vadd.f32 %v796, %v339
    %v798 = vsel %vm437, %v340, 0.0
    %v799 = vadd.f32 %v797, %v798
    %800 = vadd.xlane.f32.xlu0 %v799
    %v801 = vpop.xlane.xlu0 %800
    %v802 = vadd.f32 %v341, %v342
    %v803 = vadd.f32 %v802, %v343
    %v804 = vadd.f32 %v803, %v344
    %v805 = vadd.f32 %v804, %v345
    %v806 = vadd.f32 %v805, %v346
    %v807 = vsel %vm437, %v347, 0.0
    %v808 = vadd.f32 %v806, %v807
    %809 = vadd.xlane.f32.xlu0 %v808
    %v810 = vpop.xlane.xlu0 %809
    %v811 = vadd.f32 %v348, %v349
    %v812 = vadd.f32 %v811, %v350
    %v813 = vadd.f32 %v812, %v351
    %v814 = vadd.f32 %v813, %v352
    %v815 = vadd.f32 %v814, %v353
    %v816 = vsel %vm437, %v354, 0.0
    %v817 = vadd.f32 %v815, %v816
    %818 = vadd.xlane.f32.xlu0 %v817
    %v819 = vpop.xlane.xlu0 %818
    %v820 = vadd.f32 %v355, %v356
    %v821 = vadd.f32 %v820, %v357
    %v822 = vadd.f32 %v821, %v358
    %v823 = vadd.f32 %v822, %v359
    %v824 = vadd.f32 %v823, %v360
    %v825 = vsel %vm437, %v361, 0.0
    %v826 = vadd.f32 %v824, %v825
    %827 = vadd.xlane.f32.xlu0 %v826
    %v828 = vpop.xlane.xlu0 %827
    %v829 = vadd.f32 %v362, %v363
    %v830 = vadd.f32 %v829, %v364
    %v831 = vadd.f32 %v830, %v365
    %v832 = vadd.f32 %v831, %v366
    %v833 = vadd.f32 %v832, %v367
    %v834 = vsel %vm437, %v368, 0.0
    %v835 = vadd.f32 %v833, %v834
    %836 = vadd.xlane.f32.xlu0 %v835
    %v837 = vpop.xlane.xlu0 %836
    %v838 = vadd.f32 %v369, %v370
    %v839 = vadd.f32 %v838, %v371
    %v840 = vadd.f32 %v839, %v372
    %v841 = vadd.f32 %v840, %v373
    %v842 = vadd.f32 %v841, %v374
    %v843 = vsel %vm437, %v375, 0.0
    %v844 = vadd.f32 %v842, %v843
    %845 = vadd.xlane.f32.xlu0 %v844
    %v846 = vpop.xlane.xlu0 %845
    %v847 = vadd.f32 %v376, %v377
    %v848 = vadd.f32 %v847, %v378
    %v849 = vadd.f32 %v848, %v379
    %v850 = vadd.f32 %v849, %v380
    %v851 = vadd.f32 %v850, %v381
    %v852 = vsel %vm437, %v382, 0.0
    %v853 = vadd.f32 %v851, %v852
    %854 = vadd.xlane.f32.xlu0 %v853
    %v855 = vpop.xlane.xlu0 %854
    %v856 = vadd.f32 %v383, %v384
    %v857 = vadd.f32 %v856, %v385
    %v858 = vadd.f32 %v857, %v386
    %v859 = vadd.f32 %v858, %v387
    %v860 = vadd.f32 %v859, %v388
    %v861 = vsel %vm437, %v389, 0.0
    %v862 = vadd.f32 %v860, %v861
    %863 = vadd.xlane.f32.xlu0 %v862
    %v864 = vpop.xlane.xlu0 %863
    %v865 = vadd.f32 %v390, %v391
    %v866 = vadd.f32 %v865, %v392
    %v867 = vadd.f32 %v866, %v393
    %v868 = vadd.f32 %v867, %v394
    %v869 = vadd.f32 %v868, %v395
    %v870 = vsel %vm437, %v396, 0.0
    %v871 = vadd.f32 %v869, %v870
    %872 = vadd.xlane.f32.xlu0 %v871
    %v873 = vpop.xlane.xlu0 %872
    %v874 = vadd.f32 %v397, %v398
    %v875 = vadd.f32 %v874, %v399
    %v876 = vadd.f32 %v875, %v400
    %v877 = vadd.f32 %v876, %v401
    %v878 = vadd.f32 %v877, %v402
    %v879 = vsel %vm437, %v403, 0.0
    %v880 = vadd.f32 %v878, %v879
    %881 = vadd.xlane.f32.xlu0 %v880
    %v882 = vpop.xlane.xlu0 %881
    %v883 = vadd.f32 %v404, %v405
    %v884 = vadd.f32 %v883, %v406
    %v885 = vadd.f32 %v884, %v407
    %v886 = vadd.f32 %v885, %v408
    %v887 = vadd.f32 %v886, %v409
    %v888 = vsel %vm437, %v410, 0.0
    %v889 = vadd.f32 %v887, %v888
    %890 = vadd.xlane.f32.xlu0 %v889
    %v891 = vpop.xlane.xlu0 %890
    %v892 = vadd.f32 %v411, %v412
    %v893 = vadd.f32 %v892, %v413
    %v894 = vadd.f32 %v893, %v414
    %v895 = vadd.f32 %v894, %v415
    %v896 = vadd.f32 %v895, %v416
    %v897 = vsel %vm437, %v417, 0.0
    %v898 = vadd.f32 %v896, %v897
    %899 = vadd.xlane.f32.xlu0 %v898
    %v900 = vpop.xlane.xlu0 %899
    %v901 = vadd.f32 %v418, %v419
    %v902 = vadd.f32 %v901, %v420
    %v903 = vadd.f32 %v902, %v421
    %v904 = vadd.f32 %v903, %v422
    %v905 = vadd.f32 %v904, %v423
    %v906 = vsel %vm437, %v424, 0.0
    %v907 = vadd.f32 %v905, %v906
    %908 = vadd.xlane.f32.xlu0 %v907
    %v909 = vpop.xlane.xlu0 %908
    %v910 = vadd.f32 %v425, %v426
    %v911 = vadd.f32 %v910, %v427
    %v912 = vadd.f32 %v911, %v428
    %v913 = vadd.f32 %v912, %v429
    %v914 = vadd.f32 %v913, %v430
    %v915 = vsel %vm437, %v431, 0.0
    %v916 = vadd.f32 %v914, %v915
    %917 = vadd.xlane.f32.xlu0 %v916
    %v918 = vpop.xlane.xlu0 %917
    %v919 = vmul.f32 %v441, 0.0012755102
    %v920 = vmul.f32 %v450, 0.0012755102
    %v921 = vmul.f32 %v459, 0.0012755102
    %v922 = vmul.f32 %v468, 0.0012755102
    %v923 = vmul.f32 %v477, 0.0012755102
    %v924 = vmul.f32 %v486, 0.0012755102
    %v925 = vmul.f32 %v495, 0.0012755102
    %v926 = vmul.f32 %v504, 0.0012755102
    %v927 = vmul.f32 %v513, 0.0012755102
    %v928 = vmul.f32 %v522, 0.0012755102
    %v929 = vmul.f32 %v531, 0.0012755102
    %v930 = vmul.f32 %v540, 0.0012755102
    %v931 = vmul.f32 %v549, 0.0012755102
    %v932 = vmul.f32 %v558, 0.0012755102
    %v933 = vmul.f32 %v567, 0.0012755102
    %v934 = vmul.f32 %v576, 0.0012755102
    %v935 = vmul.f32 %v585, 0.0012755102
    %v936 = vmul.f32 %v594, 0.0012755102
    %v937 = vmul.f32 %v603, 0.0012755102
    %v938 = vmul.f32 %v612, 0.0012755102
    %v939 = vmul.f32 %v621, 0.0012755102
    %v940 = vmul.f32 %v630, 0.0012755102
    %v941 = vmul.f32 %v639, 0.0012755102
    %v942 = vmul.f32 %v648, 0.0012755102
    %v943 = vmul.f32 %v657, 0.0012755102
    %v944 = vmul.f32 %v666, 0.0012755102
    %v945 = vmul.f32 %v675, 0.0012755102
    %v946 = vmul.f32 %v684, 0.0012755102
    %v947 = vmul.f32 %v693, 0.0012755102
    %v948 = vmul.f32 %v702, 0.0012755102
    %v949 = vmul.f32 %v711, 0.0012755102
    %v950 = vmul.f32 %v720, 0.0012755102
    %v951 = vmul.f32 %v729, 0.0012755102
    %v952 = vmul.f32 %v738, 0.0012755102
    %v953 = vmul.f32 %v747, 0.0012755102
    %v954 = vmul.f32 %v756, 0.0012755102
    %v955 = vmul.f32 %v765, 0.0012755102
    %v956 = vmul.f32 %v774, 0.0012755102
    %v957 = vmul.f32 %v783, 0.0012755102
    %v958 = vmul.f32 %v792, 0.0012755102
    %v959 = vmul.f32 %v801, 0.0012755102
    %v960 = vmul.f32 %v810, 0.0012755102
    %v961 = vmul.f32 %v819, 0.0012755102
    %v962 = vmul.f32 %v828, 0.0012755102
    %v963 = vmul.f32 %v837, 0.0012755102
    %v964 = vmul.f32 %v846, 0.0012755102
    %v965 = vmul.f32 %v855, 0.0012755102
    %v966 = vmul.f32 %v864, 0.0012755102
    %v967 = vmul.f32 %v873, 0.0012755102
    %v968 = vmul.f32 %v882, 0.0012755102
    %v969 = vmul.f32 %v891, 0.0012755102
    %v970 = vmul.f32 %v900, 0.0012755102
    %v971 = vmul.f32 %v909, 0.0012755102
    %v972 = vmul.f32 %v918, 0.0012755102
    %v973 = vld [vmem:[#allocation5] sm:$0xff]
    %v974 = vld [vmem:[#allocation5 + $0x8] sm:$0xff]
    %v975 = vld [vmem:[#allocation5 + $0x10] sm:$0xff]
    %v976 = vld [vmem:[#allocation5 + $0x18] sm:$0xff]
    %v977 = vld [vmem:[#allocation5 + $0x20] sm:$0xff]
    %v978 = vld [vmem:[#allocation5 + $0x28] sm:$0xff]
    %v979 = vld [vmem:[#allocation5 + $0x30] sm:$0xff]
    %v980 = vld [vmem:[#allocation5 + $0x38] sm:$0xff]
    %v981 = vld [vmem:[#allocation5 + $0x40] sm:$0x3]
    %v982 = vld [vmem:[#allocation5 + $0x48] sm:$0x3]
    %v983 = vld [vmem:[#allocation5 + $0x50] sm:$0x3]
    %v984 = vld [vmem:[#allocation5 + $0x58] sm:$0x3]
    %v985 = vld [vmem:[#allocation7] sm:$0x1]
    %v1040 = vlaneseq
    %v1041 = vand.u32 %v1040, 127
    %v1042 = vlaneseq
    %v1043 = vshrl.u32 %v1042, 7
    %v1044 = vsub.s32 %v1041, %v1043
    %v1045 = vrot.slane %v919, %v1044
    %v1046 = vadd.s32 %v1041, 4294967288
    %v1047 = vlaneseq
    %v1048 = vshrl.u32 %v1047, 7
    %v1049 = vsub.s32 %v1046, %v1048
    %v1050 = vrot.slane %v920, %v1049
    %vm1051 = vcmask 130112
    %v1052 = vsel %vm1051, %v1050, %v1045
    %v1053 = vadd.s32 %v1041, 4294967280
    %v1054 = vlaneseq
    %v1055 = vshrl.u32 %v1054, 7
    %v1056 = vsub.s32 %v1053, %v1055
    %v1057 = vrot.slane %v921, %v1056
    %vm1058 = vcmask 195712
    %v1059 = vsel %vm1058, %v1057, %v1052
    %v1060 = vadd.s32 %v1041, 4294967272
    %v1061 = vlaneseq
    %v1062 = vshrl.u32 %v1061, 7
    %v1063 = vsub.s32 %v1060, %v1062
    %v1064 = vrot.slane %v922, %v1063
    %vm1065 = vcmask 261312
    %v1066 = vsel %vm1065, %v1064, %v1059
    %v1067 = vadd.s32 %v1041, 4294967264
    %v1068 = vlaneseq
    %v1069 = vshrl.u32 %v1068, 7
    %v1070 = vsub.s32 %v1067, %v1069
    %v1071 = vrot.slane %v923, %v1070
    %vm1072 = vcmask 326912
    %v1073 = vsel %vm1072, %v1071, %v1066
    %v1074 = vadd.s32 %v1041, 4294967256
    %v1075 = vlaneseq
    %v1076 = vshrl.u32 %v1075, 7
    %v1077 = vsub.s32 %v1074, %v1076
    %v1078 = vrot.slane %v924, %v1077
    %vm1079 = vcmask 392512
    %v1080 = vsel %vm1079, %v1078, %v1073
    %v1081 = vadd.s32 %v1041, 4294967248
    %v1082 = vlaneseq
    %v1083 = vshrl.u32 %v1082, 7
    %v1084 = vsub.s32 %v1081, %v1083
    %v1085 = vrot.slane %v925, %v1084
    %vm1086 = vcmask 458112
    %v1087 = vsel %vm1086, %v1085, %v1080
    %v1088 = vadd.s32 %v1041, 4294967240
    %v1089 = vlaneseq
    %v1090 = vshrl.u32 %v1089, 7
    %v1091 = vsub.s32 %v1088, %v1090
    %v1092 = vrot.slane %v926, %v1091
    %vm1093 = vcmask 523712
    %v1094 = vsel %vm1093, %v1092, %v1087
    %v1095 = vadd.s32 %v1041, 4294967232
    %v1096 = vlaneseq
    %v1097 = vshrl.u32 %v1096, 7
    %v1098 = vsub.s32 %v1095, %v1097
    %v1099 = vrot.slane %v927, %v1098
    %vm1100 = vcmask 589312
    %v1101 = vsel %vm1100, %v1099, %v1094
    %v1102 = vadd.s32 %v1041, 4294967224
    %v1103 = vlaneseq
    %v1104 = vshrl.u32 %v1103, 7
    %v1105 = vsub.s32 %v1102, %v1104
    %v1106 = vrot.slane %v928, %v1105
    %vm1107 = vcmask 654912
    %v1108 = vsel %vm1107, %v1106, %v1101
    %v1109 = vadd.s32 %v1041, 4294967216
    %v1110 = vlaneseq
    %v1111 = vshrl.u32 %v1110, 7
    %v1112 = vsub.s32 %v1109, %v1111
    %v1113 = vrot.slane %v929, %v1112
    %vm1114 = vcmask 720512
    %v1115 = vsel %vm1114, %v1113, %v1108
    %v1116 = vadd.s32 %v1041, 4294967208
    %v1117 = vlaneseq
    %v1118 = vshrl.u32 %v1117, 7
    %v1119 = vsub.s32 %v1116, %v1118
    %v1120 = vrot.slane %v930, %v1119
    %vm1121 = vcmask 786112
    %v1122 = vsel %vm1121, %v1120, %v1115
    %v1123 = vadd.s32 %v1041, 4294967200
    %v1124 = vlaneseq
    %v1125 = vshrl.u32 %v1124, 7
    %v1126 = vsub.s32 %v1123, %v1125
    %v1127 = vrot.slane %v931, %v1126
    %vm1128 = vcmask 851712
    %v1129 = vsel %vm1128, %v1127, %v1122
    %v1130 = vadd.s32 %v1041, 4294967192
    %v1131 = vlaneseq
    %v1132 = vshrl.u32 %v1131, 7
    %v1133 = vsub.s32 %v1130, %v1132
    %v1134 = vrot.slane %v932, %v1133
    %vm1135 = vcmask 917312
    %v1136 = vsel %vm1135, %v1134, %v1129
    %v1137 = vadd.s32 %v1041, 4294967184
    %v1138 = vlaneseq
    %v1139 = vshrl.u32 %v1138, 7
    %v1140 = vsub.s32 %v1137, %v1139
    %v1141 = vrot.slane %v933, %v1140
    %vm1142 = vcmask 982912
    %v1143 = vsel %vm1142, %v1141, %v1136
    %v1144 = vadd.s32 %v1041, 4294967176
    %v1145 = vlaneseq
    %v1146 = vshrl.u32 %v1145, 7
    %v1147 = vsub.s32 %v1144, %v1146
    %v1148 = vrot.slane %v934, %v1147
    %vm1149 = vcmask 1048512
    %v1150 = vsel %vm1149, %v1148, %v1143
    %v1151 = vlaneseq
    %v1152 = vshrl.u32 %v1151, 7
    %v1153 = vsub.s32 %v1041, %v1152
    %v1154 = vrot.slane %v935, %v1153
    %v1155 = vlaneseq
    %v1156 = vshrl.u32 %v1155, 7
    %v1157 = vsub.s32 %v1046, %v1156
    %v1158 = vrot.slane %v936, %v1157
    %v1159 = vsel %vm1051, %v1158, %v1154
    %v1160 = vlaneseq
    %v1161 = vshrl.u32 %v1160, 7
    %v1162 = vsub.s32 %v1053, %v1161
    %v1163 = vrot.slane %v937, %v1162
    %v1164 = vsel %vm1058, %v1163, %v1159
    %v1165 = vlaneseq
    %v1166 = vshrl.u32 %v1165, 7
    %v1167 = vsub.s32 %v1060, %v1166
    %v1168 = vrot.slane %v938, %v1167
    %v1169 = vsel %vm1065, %v1168, %v1164
    %v1170 = vlaneseq
    %v1171 = vshrl.u32 %v1170, 7
    %v1172 = vsub.s32 %v1067, %v1171
    %v1173 = vrot.slane %v939, %v1172
    %v1174 = vsel %vm1072, %v1173, %v1169
    %v1175 = vlaneseq
    %v1176 = vshrl.u32 %v1175, 7
    %v1177 = vsub.s32 %v1074, %v1176
    %v1178 = vrot.slane %v940, %v1177
    %v1179 = vsel %vm1079, %v1178, %v1174
    %v1180 = vlaneseq
    %v1181 = vshrl.u32 %v1180, 7
    %v1182 = vsub.s32 %v1081, %v1181
    %v1183 = vrot.slane %v941, %v1182
    %v1184 = vsel %vm1086, %v1183, %v1179
    %v1185 = vlaneseq
    %v1186 = vshrl.u32 %v1185, 7
    %v1187 = vsub.s32 %v1088, %v1186
    %v1188 = vrot.slane %v942, %v1187
    %v1189 = vsel %vm1093, %v1188, %v1184
    %v1190 = vlaneseq
    %v1191 = vshrl.u32 %v1190, 7
    %v1192 = vsub.s32 %v1095, %v1191
    %v1193 = vrot.slane %v943, %v1192
    %v1194 = vsel %vm1100, %v1193, %v1189
    %v1195 = vlaneseq
    %v1196 = vshrl.u32 %v1195, 7
    %v1197 = vsub.s32 %v1102, %v1196
    %v1198 = vrot.slane %v944, %v1197
    %v1199 = vsel %vm1107, %v1198, %v1194
    %v1200 = vlaneseq
    %v1201 = vshrl.u32 %v1200, 7
    %v1202 = vsub.s32 %v1109, %v1201
    %v1203 = vrot.slane %v945, %v1202
    %v1204 = vsel %vm1114, %v1203, %v1199
    %v1205 = vlaneseq
    %v1206 = vshrl.u32 %v1205, 7
    %v1207 = vsub.s32 %v1116, %v1206
    %v1208 = vrot.slane %v946, %v1207
    %v1209 = vsel %vm1121, %v1208, %v1204
    %v1210 = vlaneseq
    %v1211 = vshrl.u32 %v1210, 7
    %v1212 = vsub.s32 %v1123, %v1211
    %v1213 = vrot.slane %v947, %v1212
    %v1214 = vsel %vm1128, %v1213, %v1209
    %v1215 = vlaneseq
    %v1216 = vshrl.u32 %v1215, 7
    %v1217 = vsub.s32 %v1130, %v1216
    %v1218 = vrot.slane %v948, %v1217
    %v1219 = vsel %vm1135, %v1218, %v1214
    %v1220 = vlaneseq
    %v1221 = vshrl.u32 %v1220, 7
    %v1222 = vsub.s32 %v1137, %v1221
    %v1223 = vrot.slane %v949, %v1222
    %v1224 = vsel %vm1142, %v1223, %v1219
    %v1225 = vlaneseq
    %v1226 = vshrl.u32 %v1225, 7
    %v1227 = vsub.s32 %v1144, %v1226
    %v1228 = vrot.slane %v950, %v1227
    %v1229 = vsel %vm1149, %v1228, %v1224
    %v1230 = vlaneseq
    %v1231 = vshrl.u32 %v1230, 7
    %v1232 = vsub.s32 %v1041, %v1231
    %v1233 = vrot.slane %v951, %v1232
    %v1234 = vlaneseq
    %v1235 = vshrl.u32 %v1234, 7
    %v1236 = vsub.s32 %v1046, %v1235
    %v1237 = vrot.slane %v952, %v1236
    %v1238 = vsel %vm1051, %v1237, %v1233
    %v1239 = vlaneseq
    %v1240 = vshrl.u32 %v1239, 7
    %v1241 = vsub.s32 %v1053, %v1240
    %v1242 = vrot.slane %v953, %v1241
    %v1243 = vsel %vm1058, %v1242, %v1238
    %v1244 = vlaneseq
    %v1245 = vshrl.u32 %v1244, 7
    %v1246 = vsub.s32 %v1060, %v1245
    %v1247 = vrot.slane %v954, %v1246
    %v1248 = vsel %vm1065, %v1247, %v1243
    %v1249 = vlaneseq
    %v1250 = vshrl.u32 %v1249, 7
    %v1251 = vsub.s32 %v1067, %v1250
    %v1252 = vrot.slane %v955, %v1251
    %v1253 = vsel %vm1072, %v1252, %v1248
    %v1254 = vlaneseq
    %v1255 = vshrl.u32 %v1254, 7
    %v1256 = vsub.s32 %v1074, %v1255
    %v1257 = vrot.slane %v956, %v1256
    %v1258 = vsel %vm1079, %v1257, %v1253
    %v1259 = vlaneseq
    %v1260 = vshrl.u32 %v1259, 7
    %v1261 = vsub.s32 %v1081, %v1260
    %v1262 = vrot.slane %v957, %v1261
    %v1263 = vsel %vm1086, %v1262, %v1258
    %v1264 = vlaneseq
    %v1265 = vshrl.u32 %v1264, 7
    %v1266 = vsub.s32 %v1088, %v1265
    %v1267 = vrot.slane %v958, %v1266
    %v1268 = vsel %vm1093, %v1267, %v1263
    %v1269 = vlaneseq
    %v1270 = vshrl.u32 %v1269, 7
    %v1271 = vsub.s32 %v1095, %v1270
    %v1272 = vrot.slane %v959, %v1271
    %v1273 = vsel %vm1100, %v1272, %v1268
    %v1274 = vlaneseq
    %v1275 = vshrl.u32 %v1274, 7
    %v1276 = vsub.s32 %v1102, %v1275
    %v1277 = vrot.slane %v960, %v1276
    %v1278 = vsel %vm1107, %v1277, %v1273
    %v1279 = vlaneseq
    %v1280 = vshrl.u32 %v1279, 7
    %v1281 = vsub.s32 %v1109, %v1280
    %v1282 = vrot.slane %v961, %v1281
    %v1283 = vsel %vm1114, %v1282, %v1278
    %v1284 = vlaneseq
    %v1285 = vshrl.u32 %v1284, 7
    %v1286 = vsub.s32 %v1116, %v1285
    %v1287 = vrot.slane %v962, %v1286
    %v1288 = vsel %vm1121, %v1287, %v1283
    %v1289 = vlaneseq
    %v1290 = vshrl.u32 %v1289, 7
    %v1291 = vsub.s32 %v1123, %v1290
    %v1292 = vrot.slane %v963, %v1291
    %v1293 = vsel %vm1128, %v1292, %v1288
    %v1294 = vlaneseq
    %v1295 = vshrl.u32 %v1294, 7
    %v1296 = vsub.s32 %v1130, %v1295
    %v1297 = vrot.slane %v964, %v1296
    %v1298 = vsel %vm1135, %v1297, %v1293
    %v1299 = vlaneseq
    %v1300 = vshrl.u32 %v1299, 7
    %v1301 = vsub.s32 %v1137, %v1300
    %v1302 = vrot.slane %v965, %v1301
    %v1303 = vsel %vm1142, %v1302, %v1298
    %v1304 = vlaneseq
    %v1305 = vshrl.u32 %v1304, 7
    %v1306 = vsub.s32 %v1144, %v1305
    %v1307 = vrot.slane %v966, %v1306
    %v1308 = vsel %vm1149, %v1307, %v1303
    %v1309 = vlaneseq
    %v1310 = vshrl.u32 %v1309, 7
    %v1311 = vsub.s32 %v1041, %v1310
    %v1312 = vrot.slane %v967, %v1311
    %v1313 = vlaneseq
    %v1314 = vshrl.u32 %v1313, 7
    %v1315 = vsub.s32 %v1046, %v1314
    %v1316 = vrot.slane %v968, %v1315
    %v1317 = vsel %vm1051, %v1316, %v1312
    %v1318 = vlaneseq
    %v1319 = vshrl.u32 %v1318, 7
    %v1320 = vsub.s32 %v1053, %v1319
    %v1321 = vrot.slane %v969, %v1320
    %v1322 = vsel %vm1058, %v1321, %v1317
    %v1323 = vlaneseq
    %v1324 = vshrl.u32 %v1323, 7
    %v1325 = vsub.s32 %v1060, %v1324
    %v1326 = vrot.slane %v970, %v1325
    %v1327 = vsel %vm1065, %v1326, %v1322
    %v1328 = vlaneseq
    %v1329 = vshrl.u32 %v1328, 7
    %v1330 = vsub.s32 %v1067, %v1329
    %v1331 = vrot.slane %v971, %v1330
    %v1332 = vsel %vm1072, %v1331, %v1327
    %v1333 = vlaneseq
    %v1334 = vshrl.u32 %v1333, 7
    %v1335 = vsub.s32 %v1074, %v1334
    %v1336 = vrot.slane %v972, %v1335
    %v1337 = vsel %vm1079, %v1336, %v1332
    %vm1341 = vcmask 392192
    %v1342 = vsel %vm1341, %v1337, 0
    %v1345 = vsel %vm1341, %v976, 0
    %v1348 = vsel %vm1341, %v980, 0
    %v1351 = vsel %vm1341, %v984, 0
    %1353 = vmatprep.subr.mxu0 %v974
    %1354 = vmatpush1.xpose.msra.mxu0 %v973
    %1355 = vmatprep.subr.mxu0 %v978
    %1356 = vmatpush1.xpose.msra.mxu0 %v977
    %1357 = vmatprep.subr.mxu0 %v982
    %1358 = vmatpush1.xpose.msra.mxu0 %v981
    %1359 = vmatprep.subr.mxu0 0.0
    %1360 = vmatpush1.xpose.msra.mxu0 0.0
    %1361 = vmatprep.subr.mxu0 0.0
    %1362 = vmatpush1.xpose.msra.mxu0 0.0
    %1363 = vmatprep.subr.mxu0 0.0
    %1364 = vmatpush1.xpose.msra.mxu0 0.0
    %1365 = vmatprep.subr.mxu0 0.0
    %1366 = vmatpush1.xpose.msra.mxu0 0.0
    %1367 = vmatprep.subr.mxu0 0.0
    %1368 = vmatpush1.xpose.msra.mxu0 0.0
    %1369 = vmatprep.subr.mxu0 0.0
    %1370 = vmatpush1.xpose.msra.mxu0 0.0
    %1371 = vmatprep.subr.mxu0 0.0
    %1372 = vmatpush1.xpose.msra.mxu0 0.0
    %1373 = vmatprep.subr.mxu0 0.0
    %1374 = vmatpush1.xpose.msra.mxu0 0.0
    %1375 = vmatprep.subr.mxu0 0.0
    %1376 = vmatpush1.xpose.msra.mxu0 0.0
    %1377 = vmatprep.subr.mxu0 0.0
    %1378 = vmatpush1.xpose.msra.mxu0 0.0
    %1379 = vmatprep.subr.mxu0 0.0
    %1380 = vmatpush1.xpose.msra.mxu0 0.0
    %1381 = vmatprep.subr.mxu0 0.0
    %1382 = vmatpush1.xpose.msra.mxu0 0.0
    %1383 = vmatprep.subr.mxu0 0.0
    %1384 = vmatpush1.xpose.msra.mxu0 0.0
    %1385 = vmatprep.subr.mxu0 0.0
    %1386 = vmatpush1.xpose.msra.mxu0 0.0
    %1387 = vmatprep.subr.mxu0 0.0
    %1388 = vmatpush1.xpose.msra.mxu0 0.0
    %1389 = vmatprep.subr.mxu0 0.0
    %1390 = vmatpush1.xpose.msra.mxu0 0.0
    %1391 = vmatprep.subr.mxu0 0.0
    %1392 = vmatpush1.xpose.msra.mxu0 0.0
    %1393 = vmatprep.subr.mxu0 0.0
    %1394 = vmatpush1.xpose.msra.mxu0 0.0
    %1395 = vmatprep.subr.mxu0 0.0
    %1396 = vmatpush1.xpose.msra.mxu0 0.0
    %1397 = vmatprep.subr.mxu0 0.0
    %1398 = vmatpush1.xpose.msra.mxu0 0.0
    %1399 = vmatprep.subr.mxu0 0.0
    %1400 = vmatpush1.xpose.msra.mxu0 0.0
    %1401 = vmatprep.subr.mxu0 0.0
    %1402 = vmatpush1.xpose.msra.mxu0 0.0
    %1403 = vmatprep.subr.mxu0 0.0
    %1404 = vmatpush1.xpose.msra.mxu0 0.0
    %1405 = vmatprep.subr.mxu0 0.0
    %1406 = vmatpush1.xpose.msra.mxu0 0.0
    %1407 = vmatprep.subr.mxu0 0.0
    %1408 = vmatpush1.xpose.msra.mxu0 0.0
    %1409 = vmatprep.subr.mxu0 0.0
    %1410 = vmatpush1.xpose.msra.mxu0 0.0
    %1411 = vmatprep.subr.mxu0 0.0
    %1412 = vmatpush1.xpose.msra.mxu0 0.0
    %1413 = vmatprep.subr.mxu0 0.0
    %1414 = vmatpush1.xpose.msra.mxu0 0.0
    %1415 = vmatprep.subr.mxu0 0.0
    %1416 = vmatpush1.xpose.msra.mxu0 0.0
    %1417 = vmatprep.mubr.f32.mxu0 %v1229
    %1418 = vmatmul.mubr.f32.gmra.mrb[0].mxu0 %v1150
    %v1419 = vpop.f32.mrb[0].mxu0
    %v1420 = vadd.f32 %v985, %v1419
    %v1421 = vpop.f32.mrb[0].mxu0
    %1422 = vdwg.mxu0
    %1423 = vmatprep.subr.mxu0 %v1345
    %1424 = vmatpush1.xpose.msra.mxu0 %v975
    %1425 = vmatprep.subr.mxu0 %v1348
    %1426 = vmatpush1.xpose.msra.mxu0 %v979
    %1427 = vmatprep.subr.mxu0 %v1351
    %1428 = vmatpush1.xpose.msra.mxu0 %v983
    %1429 = vmatprep.subr.mxu0 0.0
    %1430 = vmatpush1.xpose.msra.mxu0 0.0
    %1431 = vmatprep.subr.mxu0 0.0
    %1432 = vmatpush1.xpose.msra.mxu0 0.0
    %1433 = vmatprep.subr.mxu0 0.0
    %1434 = vmatpush1.xpose.msra.mxu0 0.0
    %1435 = vmatprep.subr.mxu0 0.0
    %1436 = vmatpush1.xpose.msra.mxu0 0.0
    %1437 = vmatprep.subr.mxu0 0.0
    %1438 = vmatpush1.xpose.msra.mxu0 0.0
    %1439 = vmatprep.subr.mxu0 0.0
    %1440 = vmatpush1.xpose.msra.mxu0 0.0
    %1441 = vmatprep.subr.mxu0 0.0
    %1442 = vmatpush1.xpose.msra.mxu0 0.0
    %1443 = vmatprep.subr.mxu0 0.0
    %1444 = vmatpush1.xpose.msra.mxu0 0.0
    %1445 = vmatprep.subr.mxu0 0.0
    %1446 = vmatpush1.xpose.msra.mxu0 0.0
    %1447 = vmatprep.subr.mxu0 0.0
    %1448 = vmatpush1.xpose.msra.mxu0 0.0
    %1449 = vmatprep.subr.mxu0 0.0
    %1450 = vmatpush1.xpose.msra.mxu0 0.0
    %1451 = vmatprep.subr.mxu0 0.0
    %1452 = vmatpush1.xpose.msra.mxu0 0.0
    %1453 = vmatprep.subr.mxu0 0.0
    %1454 = vmatpush1.xpose.msra.mxu0 0.0
    %1455 = vmatprep.subr.mxu0 0.0
    %1456 = vmatpush1.xpose.msra.mxu0 0.0
    %1457 = vmatprep.subr.mxu0 0.0
    %1458 = vmatpush1.xpose.msra.mxu0 0.0
    %1459 = vmatprep.subr.mxu0 0.0
    %1460 = vmatpush1.xpose.msra.mxu0 0.0
    %1461 = vmatprep.subr.mxu0 0.0
    %1462 = vmatpush1.xpose.msra.mxu0 0.0
    %1463 = vmatprep.subr.mxu0 0.0
    %1464 = vmatpush1.xpose.msra.mxu0 0.0
    %1465 = vmatprep.subr.mxu0 0.0
    %1466 = vmatpush1.xpose.msra.mxu0 0.0
    %1467 = vmatprep.subr.mxu0 0.0
    %1468 = vmatpush1.xpose.msra.mxu0 0.0
    %1469 = vmatprep.subr.mxu0 0.0
    %1470 = vmatpush1.xpose.msra.mxu0 0.0
    %1471 = vmatprep.subr.mxu0 0.0
    %1472 = vmatpush1.xpose.msra.mxu0 0.0
    %1473 = vmatprep.subr.mxu0 0.0
    %1474 = vmatpush1.xpose.msra.mxu0 0.0
    %1475 = vmatprep.subr.mxu0 0.0
    %1476 = vmatpush1.xpose.msra.mxu0 0.0
    %1477 = vmatprep.subr.mxu0 0.0
    %1478 = vmatpush1.xpose.msra.mxu0 0.0
    %1479 = vmatprep.subr.mxu0 0.0
    %1480 = vmatpush1.xpose.msra.mxu0 0.0
    %1481 = vmatprep.subr.mxu0 0.0
    %1482 = vmatpush1.xpose.msra.mxu0 0.0
    %1483 = vmatprep.subr.mxu0 0.0
    %1484 = vmatpush1.xpose.msra.mxu0 0.0
    %1485 = vmatprep.subr.mxu0 0.0
    %1486 = vmatpush1.xpose.msra.mxu0 0.0
    %1487 = vmatprep.mubr.f32.mxu0 %v1342
    %1488 = vmatmul.mubr.f32.gmra.mrb[0].mxu0 %v1308
    %v1489 = vpop.f32.mrb[0].mxu0
    %v1490 = vadd.f32 %v1420, %v1489
    %v1491 = vpop.f32.mrb[0].mxu0
    %1492 = vdwg.mxu0
    %vm1493 = vcmask 139264
    %1494 = vst.msk [vmem:[#allocation8] sm:$0x1] %vm1493, %v1490
    // Predicated region
    $region26: #{tpu_custom_call.1} parent=1 // pred_check
      _
    $region27: #{tpu_custom_call.1} parent=1 // pred_check_branch
      %1496 = sbr.rel (0) target = $region29
    $region28: #{tpu_custom_call.1} parent=1 // pred_region
      %s1498 = ssub.s32 16, 16
      %1499 = vsyncadd [#allocation4], %s1498
      %s1501 = sshll.u32 [#allocation8], 4
      %s1502 = int_to_ptr.vmem [resolvable:$true] %s1501
      %1504 = dma.vmem_to_hbm [thread:$0]  %s1502, 16, %s3, [#allocation4]
    $region29: #{tpu_custom_call.1} parent=1 // pred_fallthru
      _
    // Predicated region
    $region30: #{tpu_custom_call.1} parent=1 // pred_check
      _
    $region31: #{tpu_custom_call.1} parent=1 // pred_check_branch
      %1506 = sbr.rel (0) target = $region33
    $region32: #{tpu_custom_call.1} parent=1 // pred_region
      %1507 = dma.done [#allocation4], 16
    $region33: #{tpu_custom_call.1} parent=1 // pred_fallthru
      _
    %1508 = vsyncpa [#allocation3], 1
    %1509 = vsyncpa [#allocation6], 1
    %1510 = vsyncpa [#allocation4], 1

</llo_original>
